<compile_context>
chip_gen: v7x
topology: tpu7x:2x2x1
jax: 0.10.0
libtpu: 0.0.40
codegen_flags: <defaults>
</compile_context>

<pallas_src>
import functools
import math

import jax
import jax.numpy as jnp
from jax import lax
from jax.experimental import pallas as pl
from jax.experimental.pallas import tpu as pltpu

_IMAGENET_MEAN = (0.485, 0.456, 0.406)
_IMAGENET_STD = (0.229, 0.224, 0.225)


def _round_up(x, m):
    return ((x + m - 1) // m) * m


# ---------------------------------------------------------------------------
# Kernel 1: feature extractor = conv (im2col matmul, K only 8-aligned) + ReLU,
# then exact adaptive_avg_pool2d / global_std_pool2d (unbiased) per frame via a
# one-pass sum / sum-of-squares computed with a block one-hot selector matmul.
# Output per frame: [mean_0..mean_{C-1}, std_0..std_{C-1}, 0...] lane-padded.
# ---------------------------------------------------------------------------
def _extractor_kernel(p_ref, w_ref, b_ref, sel_ref, o_ref, *,
                      tb, n_spatial, c_out, f_pad):
    y = jnp.dot(p_ref[...], w_ref[...],
                preferred_element_type=jnp.float32) + b_ref[...]
    y = jnp.maximum(y, 0.0)                               # (tb*n_spatial, c_out)
    # Per-frame sum / sum-of-squares on the MXU via a (tb, tb*n_spatial)
    # block one-hot selector (replaces per-frame Python loop + masked stores).
    s1 = jnp.dot(sel_ref[...], y, preferred_element_type=jnp.float32)      # (tb, c_out)
    s2 = jnp.dot(sel_ref[...], y * y, preferred_element_type=jnp.float32)  # (tb, c_out)
    mean = s1 * jnp.float32(1.0 / n_spatial)
    var = (s2 - s1 * mean) * jnp.float32(1.0 / (n_spatial - 1))  # unbiased (torch.std)
    std = jnp.sqrt(jnp.maximum(var, 0.0))
    if f_pad > 2 * c_out:
        feat = jnp.concatenate(
            [mean, std, jnp.zeros((tb, f_pad - 2 * c_out), jnp.float32)], axis=1)
    else:
        feat = jnp.concatenate([mean, std], axis=1)
    o_ref[...] = feat                                      # one lane-dense store


def _im2col(x, k, stride, pad):
    T, C, H, W = x.shape
    OH = (H + 2 * pad - k) // stride + 1
    OW = (W + 2 * pad - k) // stride + 1
    xp = jnp.pad(x, ((0, 0), (0, 0), (pad, pad), (pad, pad)))
    cols = []
    for di in range(k):
        for dj in range(k):
            cols.append(xp[:, :, di:di + stride * OH:stride, dj:dj + stride * OW:stride])
    p = jnp.stack(cols, axis=2)                                    # [T, C, k*k, OH, OW]
    p = p.transpose(0, 3, 4, 1, 2).reshape(T, OH * OW, C * k * k)  # (c, kh, kw) order
    return p, OH, OW


def extract_features(image, conv_w, conv_b, mean, std, *, stride=2, pad=1,
                     frame_block=8):
    T, C, H, W = image.shape
    c_out, _, k, _ = conv_w.shape
    mean_a = jnp.asarray(mean, jnp.float32)
    std_a = jnp.asarray(std, jnp.float32)
    # Fold transforms.Normalize: 1/std into conv weights; mean shift before the
    # im2col gather so zero-padding matches zero-padding the normalized image.
    w_fold = conv_w.astype(jnp.float32) / std_a[None, :, None, None]
    x_shift = image.astype(jnp.float32) - mean_a[None, :, None, None]

    patches, OH, OW = _im2col(x_shift, k, stride, pad)             # glue (XLA fusion)
    n_spatial = OH * OW
    Kf = C * k * k
    Ka = _round_up(Kf, 8)                # sublane-align only; NO 128-lane pad in HBM
    Fp = _round_up(2 * c_out, 128)       # lane-dense output slab
    TB = frame_block                     # frames per grid step
    assert TB % 8 == 0, "frame_block must be a multiple of 8 (sublane tiling)"
    Tp = _round_up(T, TB)
    M = TB * n_spatial

    patches = jnp.pad(patches, ((0, Tp - T), (0, 0), (0, Ka - Kf)))
    p2d = patches.reshape(Tp * n_spatial, Ka)
    w2d = jnp.pad(w_fold.reshape(c_out, Kf).T, ((0, Ka - Kf), (0, 0)))  # (Ka, c_out)
    b2d = conv_b.reshape(1, c_out).astype(jnp.float32)
    # block one-hot selector: sel[f, j] = 1 iff patch j of the block is frame f.
    sel = (jnp.arange(M)[None, :] // n_spatial
           == jnp.arange(TB)[:, None]).astype(jnp.float32)              # (TB, M)

    kern = functools.partial(_extractor_kernel, tb=TB, n_spatial=n_spatial,
                             c_out=c_out, f_pad=Fp)
    out = pl.pallas_call(
        kern,
        out_shape=jax.ShapeDtypeStruct((Tp, Fp), jnp.float32),
        grid_spec=pltpu.PrefetchScalarGridSpec(
            num_scalar_prefetch=0,
            grid=(Tp // TB,),
            in_specs=[
                pl.BlockSpec((M, Ka), lambda t: (t, 0)),
                pl.BlockSpec((Ka, c_out), lambda t: (0, 0)),
                pl.BlockSpec((1, c_out), lambda t: (0, 0)),
                pl.BlockSpec((TB, M), lambda t: (0, 0)),
            ],
            out_specs=pl.BlockSpec((TB, Fp), lambda t: (t, 0)),
        ),
        compiler_params=pltpu.CompilerParams(
            dimension_semantics=("parallel",),
            vmem_limit_bytes=48 * 1024 * 1024),
    )(p2d, w2d, b2d, sel)
    # (T, Fp): real features in lanes [0, 2*c_out), zeros elsewhere.
    return out[:T]


# ---------------------------------------------------------------------------
# Kernel 2a: VQAModel head, parallel projection pass over frame chunks:
#   Linear(F->R) then ONE fused GRU input projection to lane-striped [r|z|n]
#   (b_ir+b_hr and b_iz+b_hz folded; b_in in the n stripe, b_hn kept separate
#   because PyTorch applies it inside r * (W_hn h + b_hn)).
# ---------------------------------------------------------------------------
def _vqa_proj_kernel(feat_ref, wdr_ref, bdr_ref, wih_ref, bi_ref, gi_ref):
    x = jnp.dot(feat_ref[...], wdr_ref[...],
                preferred_element_type=jnp.float32) + bdr_ref[...]       # (chunk, R)
    gi_ref[...] = jnp.dot(x, wih_ref[...],
                          preferred_element_type=jnp.float32) + bi_ref[...]


# ---------------------------------------------------------------------------
# Kernel 2b: sequential GRU recurrence -> Linear(H->1) -> _sitp -> Sigmoid -> nlm
# ---------------------------------------------------------------------------
def _vqa_rec_kernel(gi_ref, whh_ref, bhn_ref, wreg_ref, breg_ref, nlm_ref,
                    rel_ref, map_ref,
                    h_scr, lsrc_scr, nsrc_scr, dsrc_scr,
                    *, seq_len, gate, tau, beta):
    h_scr[...] = jnp.zeros_like(h_scr)
    # hoist recurrent weights/bias out of the latency-bound loop (loaded once)
    whh = whh_ref[...]                                    # (gate, 3*gate)
    bhn = bhn_ref[...]                                    # (1, gate)

    def gru_step(t, h):
        gh = jnp.dot(h, whh, preferred_element_type=jnp.float32)      # (1, 3*gate)
        gi = gi_ref[pl.ds(t, 1), :]                                    # (1, 3*gate)
        r = jax.nn.sigmoid(gi[:, 0:gate] + gh[:, 0:gate])
        z = jax.nn.sigmoid(gi[:, gate:2 * gate] + gh[:, gate:2 * gate])
        n = jnp.tanh(gi[:, 2 * gate:3 * gate] + r * (gh[:, 2 * gate:3 * gate] + bhn))
        h_new = (1.0 - z) * n + z * h
        h_scr[pl.ds(t, 1), :] = h_new
        return h_new

    lax.fori_loop(0, seq_len, gru_step, jnp.zeros((1, gate), jnp.float32),
                  unroll=4 if seq_len % 4 == 0 else 1)

    # per-frame scores: one batched matmul over the whole sequence
    q_all = jnp.dot(h_scr[...], wreg_ref[...],
                    preferred_element_type=jnp.float32) + breg_ref[...]   # (Tp, 1)
    qv = q_all[0:seq_len, :]                                              # (T, 1)
    eq = jnp.exp(-qv)
    qp = 1e4
    eqp = math.exp(-qp)              # underflows to 0.0 in f32, same as torch

    # _sitp as tau-windowed pooling, O(T*tau); runs once per video.
    lsrc_scr[...] = jnp.full_like(lsrc_scr, jnp.inf)
    lsrc_scr[tau - 1:tau - 1 + seq_len, :] = qv
    nsrc_scr[...] = jnp.full_like(nsrc_scr, qp * eqp)
    nsrc_scr[0:seq_len, :] = qv * eq
    dsrc_scr[...] = jnp.full_like(dsrc_scr, eqp)
    dsrc_scr[0:seq_len, :] = eq

    l_acc = lsrc_scr[0:seq_len, :]      # trailing-window min (== -max_pool(-q))
    n_acc = nsrc_scr[0:seq_len, :]      # leading-window sum of q*exp(-q)
    d_acc = dsrc_scr[0:seq_len, :]      # leading-window sum of exp(-q)
    for s in range(1, tau):
        l_acc = jnp.minimum(l_acc, lsrc_scr[s:s + seq_len, :])
        n_acc = n_acc + nsrc_scr[s:s + seq_len, :]
        d_acc = d_acc + dsrc_scr[s:s + seq_len, :]
    m = n_acc / d_acc
    q_hat = beta * m + (1.0 - beta) * l_acc                               # (T, 1)
    rel_pre = jnp.sum(q_hat, axis=0, keepdims=True) * jnp.float32(1.0 / seq_len)

    rel = jax.nn.sigmoid(rel_pre)                                         # self.bound
    p = nlm_ref[...]                                        # (1,4): w1, b1, w2, b2
    rel_ref[...] = rel
    map_ref[...] = p[:, 2:3] * jax.nn.sigmoid(p[:, 0:1] * rel + p[:, 1:2]) + p[:, 3:4]


def vqa_forward(feat, params, *, tau=12, beta=0.5):
    T, Fp = feat.shape
    f0, R = params["w_dr"].shape
    Hd = params["w_hh"].shape[0]
    gate = _round_up(Hd, 128)                       # 128-lane stripe per GRU gate
    chunk = max(8, min(128, _round_up(T, 8)))       # big chunks -> few grid steps
    Tp = _round_up(T, chunk)

    feat_p = jnp.pad(feat, ((0, Tp - T), (0, 0)))
    # zero-pad reduction-weight rows to match the lane-padded feature slab (exact)
    w_dr = jnp.pad(params["w_dr"].astype(jnp.float32), ((0, Fp - f0), (0, 0)))
    b_dr = params["b_dr"].reshape(1, R).astype(jnp.float32)

    w_ih = params["w_ih"].astype(jnp.float32)       # (R, 3*Hd), gate order r|z|n
    b_ih = params["b_ih"].reshape(1, 3 * Hd).astype(jnp.float32)
    w_hh = params["w_hh"].astype(jnp.float32)       # (Hd, 3*Hd)
    b_hh = params["b_hh"].reshape(1, 3 * Hd).astype(jnp.float32)

    def pad_cols(w):                                 # (rows, Hd) -> (rows, gate)
        return jnp.pad(w, ((0, 0), (0, gate - Hd)))

    def pad_block(w):                                # (Hd, Hd) -> (gate, gate)
        return jnp.pad(w, ((0, gate - Hd), (0, gate - Hd)))

    # fused, lane-striped input projection [r | z | n]
    wih_pack = jnp.concatenate(
        [pad_cols(w_ih[:, :Hd]), pad_cols(w_ih[:, Hd:2 * Hd]),
         pad_cols(w_ih[:, 2 * Hd:])], axis=1)                        # (R, 3*gate)
    # biases folded at projection time (b_hn stays separate, see kernel)
    bi_pack = jnp.concatenate(
        [pad_cols(b_ih[:, :Hd] + b_hh[:, :Hd]),
         pad_cols(b_ih[:, Hd:2 * Hd] + b_hh[:, Hd:2 * Hd]),
         pad_cols(b_ih[:, 2 * Hd:])], axis=1)                        # (1, 3*gate)
    # fused recurrent projection; h is kept gate-wide (rows >= Hd are zero)
    whh_pack = jnp.concatenate(
        [pad_block(w_hh[:, :Hd]), pad_block(w_hh[:, Hd:2 * Hd]),
         pad_block(w_hh[:, 2 * Hd:])], axis=1)                       # (gate, 3*gate)
    bhn_pack = pad_cols(b_hh[:, 2 * Hd:])                            # (1, gate)
    w_reg = jnp.pad(params["w_reg"].astype(jnp.float32), ((0, gate - Hd), (0, 0)))
    b_reg = params["b_reg"].reshape(1, 1).astype(jnp.float32)
    nlm = jnp.asarray(params["nlm"], jnp.float32).reshape(1, 4)

    const = lambda i: (0, 0)

    # pass 1: embarrassingly parallel over chunks (megacore-shardable on v7x)
    gi = pl.pallas_call(
        _vqa_proj_kernel,
        out_shape=jax.ShapeDtypeStruct((Tp, 3 * gate), jnp.float32),
        grid_spec=pltpu.PrefetchScalarGridSpec(
            num_scalar_prefetch=0,
            grid=(Tp // chunk,),
            in_specs=[
                pl.BlockSpec((chunk, Fp), lambda i: (i, 0)),
                pl.BlockSpec((Fp, R), const),
                pl.BlockSpec((1, R), const),
                pl.BlockSpec((R, 3 * gate), const),
                pl.BlockSpec((1, 3 * gate), const),
            ],
            out_specs=pl.BlockSpec((chunk, 3 * gate), lambda i: (i, 0)),
        ),
        compiler_params=pltpu.CompilerParams(dimension_semantics=("parallel",)),
    )(feat_p, w_dr, b_dr, wih_pack, bi_pack)

    # pass 2: sequential recurrence + regression + sitp + sigmoid + nlm
    kern = functools.partial(_vqa_rec_kernel, seq_len=T, gate=gate,
                             tau=tau, beta=beta)
    rel, mapped = pl.pallas_call(
        kern,
        out_shape=(jax.ShapeDtypeStruct((1, 1), jnp.float32),
                   jax.ShapeDtypeStruct((1, 1), jnp.float32)),
        grid_spec=pltpu.PrefetchScalarGridSpec(
            num_scalar_prefetch=0,
            grid=(1,),
            in_specs=[
                pl.BlockSpec((Tp, 3 * gate), const),
                pl.BlockSpec((gate, 3 * gate), const),
                pl.BlockSpec((1, gate), const),
                pl.BlockSpec((gate, 1), const),
                pl.BlockSpec((1, 1), const),
                pl.BlockSpec((1, 4), const),
            ],
            out_specs=(pl.BlockSpec((1, 1), const),
                       pl.BlockSpec((1, 1), const)),
            scratch_shapes=[
                pltpu.VMEM((Tp, gate), jnp.float32),          # h per step
                pltpu.VMEM((T + tau - 1, 1), jnp.float32),    # sitp l source
                pltpu.VMEM((T + tau - 1, 1), jnp.float32),    # sitp num source
                pltpu.VMEM((T + tau - 1, 1), jnp.float32),    # sitp den source
            ],
        ),
        compiler_params=pltpu.CompilerParams(dimension_semantics=("arbitrary",)),
    )(gi, whh_pack, bhn_pack, w_reg, b_reg, nlm)
    return rel, mapped


def metric_model_forward(image, params):
    feat = extract_features(image, params["conv_w"], params["conv_b"],
                            _IMAGENET_MEAN, _IMAGENET_STD)     # (T, Fp), == get_features
    _, mapped = vqa_forward(feat, params)                      # batch of 1 folded out
    return mapped.reshape(1)                                   # matches torch `out`


# ---------------------------------------------------------------------------
# Pure-JAX reference (faithful windowed pooling) for a numerical sanity check.
# ---------------------------------------------------------------------------
def _ref_sitp(q, tau=12, beta=0.5):
    T = q.shape[0]
    qr = q.reshape(-1)
    qm = jnp.full((tau - 1,), -jnp.inf, jnp.float32)
    qp = jnp.full((tau - 1,), 1e4, jnp.float32)
    cat_l = jnp.concatenate([qm, -qr])
    l = -jnp.stack([jnp.max(cat_l[i:i + tau]) for i in range(T)])
    cat_m = jnp.concatenate([qr * jnp.exp(-qr), qp * jnp.exp(-qp)])
    cat_n = jnp.concatenate([jnp.exp(-qr), jnp.exp(-qp)])
    m = jnp.stack([jnp.mean(cat_m[i:i + tau]) for i in range(T)])
    n = jnp.stack([jnp.mean(cat_n[i:i + tau]) for i in range(T)])
    m = m / n
    return jnp.mean(beta * m + (1 - beta) * l)


def reference_forward(image, params):
    mean = jnp.array(_IMAGENET_MEAN, jnp.float32)
    std = jnp.array(_IMAGENET_STD, jnp.float32)
    x = (image - mean[None, :, None, None]) / std[None, :, None, None]
    y = lax.conv_general_dilated(x, params["conv_w"], (2, 2), ((1, 1), (1, 1)),
                                 dimension_numbers=("NCHW", "OIHW", "NCHW"))
    y = jnp.maximum(y + params["conv_b"][None, :, None, None], 0.0)
    T, C = y.shape[0], y.shape[1]
    yf = y.reshape(T, C, -1)
    feat = jnp.concatenate([jnp.mean(yf, axis=2), jnp.std(yf, axis=2, ddof=1)], axis=1)
    x = feat @ params["w_dr"] + params["b_dr"]
    H = params["w_hh"].shape[0]
    h = jnp.zeros((1, H), jnp.float32)
    qs = []
    for t in range(T):
        gi = x[t:t + 1] @ params["w_ih"] + params["b_ih"]
        gh = h @ params["w_hh"] + params["b_hh"]
        r = jax.nn.sigmoid(gi[:, :H] + gh[:, :H])
        z = jax.nn.sigmoid(gi[:, H:2 * H] + gh[:, H:2 * H])
        n = jnp.tanh(gi[:, 2 * H:] + r * gh[:, 2 * H:])
        h = (1 - z) * n + z * h
        qs.append(h @ params["w_reg"] + params["b_reg"])
    q = jnp.concatenate(qs, axis=0)                                  # (T, 1)
    rel = jax.nn.sigmoid(_ref_sitp(q))
    w1, b1, w2, b2 = params["nlm"]
    return w2 * jax.nn.sigmoid(w1 * rel + b1) + b2


if __name__ == "__main__":
    key = jax.random.PRNGKey(0)
    T, C, Hs, Ws = 16, 3, 16, 16          # small video: 16 frames of 3x16x16
    C_OUT, R, HID = 8, 32, 16             # stand-in backbone width / reduced / GRU hidden
    keys = jax.random.split(key, 8)
    image = jax.random.uniform(keys[0], (T, C, Hs, Ws), jnp.float32)
    params = {
        "conv_w": 0.2 * jax.random.normal(keys[1], (C_OUT, C, 3, 3), jnp.float32),
        "conv_b": 0.1 * jax.random.normal(keys[2], (C_OUT,), jnp.float32),
        "w_dr": 0.2 * jax.random.normal(keys[3], (2 * C_OUT, R), jnp.float32),
        "b_dr": 0.1 * jax.random.normal(keys[4], (R,), jnp.float32),
        "w_ih": 0.3 * jax.random.normal(keys[5], (R, 3 * HID), jnp.float32),
        "w_hh": 0.3 * jax.random.normal(keys[6], (HID, 3 * HID), jnp.float32),
        "b_ih": 0.1 * jnp.ones((3 * HID,), jnp.float32),
        "b_hh": 0.05 * jnp.ones((3 * HID,), jnp.float32),
        "w_reg": 0.5 * jax.random.normal(keys[7], (HID, 1), jnp.float32),
        "b_reg": jnp.array([0.1], jnp.float32),
        # nlm init from VQAModel.__init__: w1=2*sqrt(3), b1=-sqrt(3), w2=1, b2=0
        "nlm": (2.0 * math.sqrt(3.0), -math.sqrt(3.0), 1.0, 0.0),
    }
    out = jax.block_until_ready(metric_model_forward(image, params))
    ref = jax.block_until_ready(reference_forward(image, params))
    assert bool(jnp.all(jnp.isfinite(out)))
    assert jnp.allclose(out, ref, atol=2e-4, rtol=2e-4), (out, ref)
    print("KERNEL_OK")
</pallas_src>

<mosaic_0001>
module attributes {stable_mosaic.version = 11 : i64} {
  func.func @_extractor_kernel(%arg0: i32, %arg1: memref<512x32xf32, #tpu.memory_space<vmem>>, %arg2: memref<32x8xf32, #tpu.memory_space<vmem>>, %arg3: memref<1x8xf32, #tpu.memory_space<vmem>>, %arg4: memref<8x512xf32, #tpu.memory_space<vmem>>, %arg5: memref<8x128xf32, #tpu.memory_space<vmem>>) attributes {dimension_semantics = [#tpu.dimension_semantics<parallel>], iteration_bounds = array<i64: 2>, scalar_prefetch = 0 : i64, scratch_operands = 0 : i64, tpu.core_type = #tpu.core_type<tc>, window_params = [{transform_indices = @transform_0, window_bounds = array<i64: 512, 32>}, {pipeline_mode = #tpu.pipeline_mode<synchronous>, transform_indices = @transform_1, window_bounds = array<i64: 32, 8>}, {pipeline_mode = #tpu.pipeline_mode<synchronous>, transform_indices = @transform_2, window_bounds = array<i64: 1, 8>}, {pipeline_mode = #tpu.pipeline_mode<synchronous>, transform_indices = @transform_3, window_bounds = array<i64: 8, 512>}, {transform_indices = @transform_4, window_bounds = array<i64: 8, 128>}]} {
    %c0 = arith.constant 0 : index
    %c0_0 = arith.constant 0 : index
    %0 = vector.load %arg1[%c0, %c0_0] : memref<512x32xf32, #tpu.memory_space<vmem>>, vector<512x32xf32>
    %c0_1 = arith.constant 0 : index
    %c0_2 = arith.constant 0 : index
    %1 = vector.load %arg2[%c0_1, %c0_2] : memref<32x8xf32, #tpu.memory_space<vmem>>, vector<32x8xf32>
    %cst = arith.constant dense<0.000000e+00> : vector<512x8xf32>
    %2 = tpu.matmul %0, %1, %cst {dimension_numbers = #tpu.dot_dimension_numbers<[1], [0], [0], [1], [0, 0, 1, 1], [], []>} : vector<512x32xf32>, vector<32x8xf32>, vector<512x8xf32> -> vector<512x8xf32>
    %c0_3 = arith.constant 0 : index
    %c0_4 = arith.constant 0 : index
    %3 = vector.load %arg3[%c0_3, %c0_4] : memref<1x8xf32, #tpu.memory_space<vmem>>, vector<1x8xf32>
    %4 = vector.broadcast %3 : vector<1x8xf32> to vector<512x8xf32>
    %5 = arith.addf %2, %4 : vector<512x8xf32>
    %cst_5 = arith.constant 0.000000e+00 : f32
    %6 = vector.broadcast %cst_5 : f32 to vector<512x8xf32>
    %7 = arith.maximumf %5, %6 : vector<512x8xf32>
    %c0_6 = arith.constant 0 : index
    %c0_7 = arith.constant 0 : index
    %8 = vector.load %arg4[%c0_6, %c0_7] : memref<8x512xf32, #tpu.memory_space<vmem>>, vector<8x512xf32>
    %cst_8 = arith.constant dense<0.000000e+00> : vector<8x8xf32>
    %9 = tpu.matmul %8, %7, %cst_8 {dimension_numbers = #tpu.dot_dimension_numbers<[1], [0], [0], [1], [0, 0, 1, 1], [], []>} : vector<8x512xf32>, vector<512x8xf32>, vector<8x8xf32> -> vector<8x8xf32>
    %c0_9 = arith.constant 0 : index
    %c0_10 = arith.constant 0 : index
    %10 = vector.load %arg4[%c0_9, %c0_10] : memref<8x512xf32, #tpu.memory_space<vmem>>, vector<8x512xf32>
    %11 = arith.mulf %7, %7 : vector<512x8xf32>
    %cst_11 = arith.constant dense<0.000000e+00> : vector<8x8xf32>
    %12 = tpu.matmul %10, %11, %cst_11 {dimension_numbers = #tpu.dot_dimension_numbers<[1], [0], [0], [1], [0, 0, 1, 1], [], []>} : vector<8x512xf32>, vector<512x8xf32>, vector<8x8xf32> -> vector<8x8xf32>
    %cst_12 = arith.constant 1.562500e-02 : f32
    %13 = vector.broadcast %cst_12 : f32 to vector<8x8xf32>
    %14 = arith.mulf %9, %13 : vector<8x8xf32>
    %15 = arith.mulf %9, %14 : vector<8x8xf32>
    %16 = arith.subf %12, %15 : vector<8x8xf32>
    %cst_13 = arith.constant 0.0158730168 : f32
    %17 = vector.broadcast %cst_13 : f32 to vector<8x8xf32>
    %18 = arith.mulf %16, %17 : vector<8x8xf32>
    %cst_14 = arith.constant 0.000000e+00 : f32
    %19 = vector.broadcast %cst_14 : f32 to vector<8x8xf32>
    %20 = arith.maximumf %18, %19 : vector<8x8xf32>
    %21 = math.sqrt %20 : vector<8x8xf32>
    %cst_15 = arith.constant 0.000000e+00 : f32
    %22 = vector.broadcast %cst_15 : f32 to vector<8x112xf32>
    %23 = tpu.concatenate %14, %21, %22 in 1 : vector<8x8xf32>, vector<8x8xf32>, vector<8x112xf32> -> vector<8x128xf32>
    %c0_16 = arith.constant 0 : index
    %c0_17 = arith.constant 0 : index
    %24 = vector.load %arg5[%c0_16, %c0_17] : memref<8x128xf32, #tpu.memory_space<vmem>>, vector<8x128xf32>
    tpu.vector_store %arg5[%c0_16, %c0_17], %23 {strides = array<i32>} : memref<8x128xf32, #tpu.memory_space<vmem>>, vector<8x128xf32>,
    return
  }
  func.func @transform_0(%arg0: i32) -> (i32, i32) {
    %c0_i32 = arith.constant 0 : i32
    %c0_i32_0 = arith.constant 0 : i32
    return %arg0, %c0_i32 : i32, i32
  }
  func.func @transform_1(%arg0: i32) -> (i32, i32) {
    %c0_i32 = arith.constant 0 : i32
    %c0_i32_0 = arith.constant 0 : i32
    %c0_i32_1 = arith.constant 0 : i32
    return %c0_i32, %c0_i32_0 : i32, i32
  }
  func.func @transform_2(%arg0: i32) -> (i32, i32) {
    %c0_i32 = arith.constant 0 : i32
    %c0_i32_0 = arith.constant 0 : i32
    %c0_i32_1 = arith.constant 0 : i32
    return %c0_i32, %c0_i32_0 : i32, i32
  }
  func.func @transform_3(%arg0: i32) -> (i32, i32) {
    %c0_i32 = arith.constant 0 : i32
    %c0_i32_0 = arith.constant 0 : i32
    %c0_i32_1 = arith.constant 0 : i32
    return %c0_i32, %c0_i32_0 : i32, i32
  }
  func.func @transform_4(%arg0: i32) -> (i32, i32) {
    %c0_i32 = arith.constant 0 : i32
    %c0_i32_0 = arith.constant 0 : i32
    return %arg0, %c0_i32 : i32, i32
  }
}

</mosaic_0001>

<llo_original>
// kernel: tpu_custom_call.1
$region0: #{tpu_custom_call.1}
  #allocation0 [shape = 'u32[]', space=smem, size = 0x4, offset = 0x4, fixed_abs, tag = 'smem constant byte address 0x4 - core index']
  #allocation1 [shape = 'u32[144,128]{1,0:T(1,128)}', space=vmem, size = 0x12000, scoped, tag = 'internal scratch']
  %s0 = inlined_call_operand.vmem [shape: f32[1024,32], index: 0, kind: input, shape index: {}]
  %s1 = inlined_call_operand.vmem [shape: f32[32,8], index: 1, kind: input, shape index: {}]
  %s2 = inlined_call_operand.vmem [shape: f32[1,8], index: 2, kind: input, shape index: {}]
  %s3 = inlined_call_operand.vmem [shape: f32[8,512], index: 3, kind: input, shape index: {}]
  %s4 = inlined_call_operand.hbm [shape: f32[16,128], index: 4, kind: output, shape index: {}]
  %s5 = sld [smem:[#allocation0]]
  $region49: #{tpu_custom_call.1} parent=0
    _
  %s7 = ssub.s32 1, %s5
  %s8 = scalar_select 0, %s7, %s5
  $region1: #{tpu_custom_call.1} parent=0
    #allocation2 [shape = 'u8[8192]{0}', space=vmem, size = 0x2000, scoped, tag = 'output window, operand 0']
    #allocation3 [shape = 's32[2]{0}', space=sflag, size = 0x8, scoped, tag = 'scoped memory for tpu_custom_call.1']
    %9 = vsyncpa [#allocation3], 0
    %s10 = scalar_lea.sflag [#allocation3], 1
    %11 = vsyncpa %s10, 0
    loop: start=0, step=1, limit=4
    $region2: #{tpu_custom_call.1} parent=1 // loop_pre_header
      _
    $region3: #{tpu_custom_call.1} parent=1 // loop_header
      %s13 = sphi 0, %s17
      %p14 = scmp.ge.s32.totalorder %s13, 4
      %s23 = sphi 0, %s25
      %s26 = sphi 0, %s23
      %s27 = sphi 0, %s26
      %s43 = sphi 0, %s27
      %s47 = sphi 0, %s47
      %s49 = sphi 0, %s47
      %s50 = sphi 0, %s49
      %s64 = sphi 0, %s50
      %s68 = sphi 0, %s68
      %s70 = sphi 0, %s68
      %s71 = sphi 0, %s70
      %s85 = sphi 0, %s71
      %s89 = sphi 0, %s89
      %s91 = sphi 0, %s89
      %s92 = sphi 0, %s91
      %s106 = sphi 0, %s92
      %s112 = sphi 0, %s114
      %s115 = sphi 0, %s112
      %s116 = sphi 0, %s115
      %s132 = sphi 0, %s116
    $region4: #{tpu_custom_call.1} parent=1 // loop_header_branch
      %16 = sbr.rel (%p14) target = $region8
    $region5: #{tpu_custom_call.1} parent=1 // loop_body
      %s18 = ssub.s32 %s13, 1
      %s19 = ssub.s32 %s13, 2
      %s20 = sadd.s32 %s13, 1
      %s21 = ssub.s32 %s13, %s20
      %p22 = scmp.eq.s32.totalorder %s21, 0
      %s24 = sadd.s32 %s23, 1
      %s25 = scalar_select %p22, %s23, %s24
      %p28 = pneg %p22
      %p29 = scmp.eq.s32.totalorder %s13, 1
      %p30 = por %p28, %p29
      %p31 = scmp.ne.s32.totalorder %s23, %s26
      %p32 = scmp.eq.s32.totalorder %s13, 0
      %p33 = por %p31, %p32
      %p34 = scmp.ne.s32.totalorder %s23, %s26
      %p35 = scmp.eq.s32.totalorder %s18, 1
      %p36 = por %p34, %p35
      %p37 = scmp.ne.s32.totalorder %s26, %s27
      %p38 = scmp.eq.s32.totalorder %s18, 0
      %p39 = por %p37, %p38
      %p40 = scmp.ne.s32.totalorder %s26, %s27
      %p41 = scmp.eq.s32.totalorder %s19, 1
      %p42 = por %p40, %p41
      %p44 = scmp.ne.s32.totalorder %s27, %s43
      %p45 = scmp.eq.s32.totalorder %s19, 0
      %p46 = por %p44, %p45
      %s48 = sadd.s32 %s47, 1
      %p51 = scmp.eq.s32.totalorder %s13, 1
      %p52 = scmp.ne.s32.totalorder %s47, %s49
      %p53 = scmp.eq.s32.totalorder %s13, 0
      %p54 = por %p52, %p53
      %p55 = scmp.ne.s32.totalorder %s47, %s49
      %p56 = scmp.eq.s32.totalorder %s18, 1
      %p57 = por %p55, %p56
      %p58 = scmp.ne.s32.totalorder %s49, %s50
      %p59 = scmp.eq.s32.totalorder %s18, 0
      %p60 = por %p58, %p59
      %p61 = scmp.ne.s32.totalorder %s49, %s50
      %p62 = scmp.eq.s32.totalorder %s19, 1
      %p63 = por %p61, %p62
      %p65 = scmp.ne.s32.totalorder %s50, %s64
      %p66 = scmp.eq.s32.totalorder %s19, 0
      %p67 = por %p65, %p66
      %s69 = sadd.s32 %s68, 1
      %p72 = scmp.eq.s32.totalorder %s13, 1
      %p73 = scmp.ne.s32.totalorder %s68, %s70
      %p74 = scmp.eq.s32.totalorder %s13, 0
      %p75 = por %p73, %p74
      %p76 = scmp.ne.s32.totalorder %s68, %s70
      %p77 = scmp.eq.s32.totalorder %s18, 1
      %p78 = por %p76, %p77
      %p79 = scmp.ne.s32.totalorder %s70, %s71
      %p80 = scmp.eq.s32.totalorder %s18, 0
      %p81 = por %p79, %p80
      %p82 = scmp.ne.s32.totalorder %s70, %s71
      %p83 = scmp.eq.s32.totalorder %s19, 1
      %p84 = por %p82, %p83
      %p86 = scmp.ne.s32.totalorder %s71, %s85
      %p87 = scmp.eq.s32.totalorder %s19, 0
      %p88 = por %p86, %p87
      %s90 = sadd.s32 %s89, 1
      %p93 = scmp.eq.s32.totalorder %s13, 1
      %p94 = scmp.ne.s32.totalorder %s89, %s91
      %p95 = scmp.eq.s32.totalorder %s13, 0
      %p96 = por %p94, %p95
      %p97 = scmp.ne.s32.totalorder %s89, %s91
      %p98 = scmp.eq.s32.totalorder %s18, 1
      %p99 = por %p97, %p98
      %p100 = scmp.ne.s32.totalorder %s91, %s92
      %p101 = scmp.eq.s32.totalorder %s18, 0
      %p102 = por %p100, %p101
      %p103 = scmp.ne.s32.totalorder %s91, %s92
      %p104 = scmp.eq.s32.totalorder %s19, 1
      %p105 = por %p103, %p104
      %p107 = scmp.ne.s32.totalorder %s92, %s106
      %p108 = scmp.eq.s32.totalorder %s19, 0
      %p109 = por %p107, %p108
      %s110 = ssub.s32 %s13, %s20
      %p111 = scmp.eq.s32.totalorder %s110, 0
      %s113 = sadd.s32 %s112, 1
      %s114 = scalar_select %p111, %s112, %s113
      %p117 = pneg %p111
      %p118 = scmp.eq.s32.totalorder %s13, 1
      %p119 = por %p117, %p118
      %p120 = scmp.ne.s32.totalorder %s112, %s115
      %p121 = scmp.eq.s32.totalorder %s13, 0
      %p122 = por %p120, %p121
      %p123 = scmp.ne.s32.totalorder %s112, %s115
      %p124 = scmp.eq.s32.totalorder %s18, 1
      %p125 = por %p123, %p124
      %p126 = scmp.ne.s32.totalorder %s115, %s116
      %p127 = scmp.eq.s32.totalorder %s18, 0
      %p128 = por %p126, %p127
      %p129 = scmp.ne.s32.totalorder %s115, %s116
      %p130 = scmp.eq.s32.totalorder %s19, 1
      %p131 = por %p129, %p130
      %p133 = scmp.ne.s32.totalorder %s116, %s132
      %p134 = scmp.eq.s32.totalorder %s19, 0
      %p135 = por %p133, %p134
      %p136 = scmp.le.s32.totalorder 1, %s13
      %p137 = scmp.lt.s32.totalorder %s13, 3
      %p138 = pnand %p136, %p137
      %p139 = pneg %p138
      // Predicated region
      $region9: #{tpu_custom_call.1} parent=5 // pred_check
        _
      $region10: #{tpu_custom_call.1} parent=5 // pred_check_branch
        %141 = sbr.rel (%p138) target = $region12
      $region11: #{tpu_custom_call.1} parent=5 // pred_region
        %s142 = ssub.s32 %s13, 1
        // Predicated region
        $region13: #{tpu_custom_call.1} parent=11 // pred_check
          %p143 = pneg %p60
        $region14: #{tpu_custom_call.1} parent=11 // pred_check_branch
          %145 = sbr.rel (%p143) target = $region16
        $region15: #{tpu_custom_call.1} parent=11 // pred_region
          _
        $region16: #{tpu_custom_call.1} parent=11 // pred_fallthru
          _
        // Predicated region
        $region17: #{tpu_custom_call.1} parent=11 // pred_check
          %p146 = pneg %p81
        $region18: #{tpu_custom_call.1} parent=11 // pred_check_branch
          %148 = sbr.rel (%p146) target = $region20
        $region19: #{tpu_custom_call.1} parent=11 // pred_region
          _
        $region20: #{tpu_custom_call.1} parent=11 // pred_fallthru
          _
        // Predicated region
        $region21: #{tpu_custom_call.1} parent=11 // pred_check
          %p149 = pneg %p102
        $region22: #{tpu_custom_call.1} parent=11 // pred_check_branch
          %151 = sbr.rel (%p149) target = $region24
        $region23: #{tpu_custom_call.1} parent=11 // pred_region
          _
        $region24: #{tpu_custom_call.1} parent=11 // pred_fallthru
          _
      $region12: #{tpu_custom_call.1} parent=5 // pred_fallthru
        _
      %p152 = scmp.lt.s32.totalorder %s13, 2
      // Predicated region
      $region25: #{tpu_custom_call.1} parent=5 // pred_check
        %p153 = pneg %p152
      $region26: #{tpu_custom_call.1} parent=5 // pred_check_branch
        %155 = sbr.rel (%p153) target = $region28
      $region27: #{tpu_custom_call.1} parent=5 // pred_region
        // Predicated region
        $region29: #{tpu_custom_call.1} parent=27 // pred_check
          %p156 = pneg %p33
        $region30: #{tpu_custom_call.1} parent=27 // pred_check_branch
          %158 = sbr.rel (%p156) target = $region32
        $region31: #{tpu_custom_call.1} parent=27 // pred_region
          %s159 = smul.u32 64, %s13
          %p160 = scmp.lt.s32.totalorder %s159, 127
          %s161 = scalar_select %p160, %s159, 127
          %s162 = smul.addr %s161, 8
          %s163 = scalar_lea.vmem %s0, %s162
          %s164 = smul.u32 64, %s13
        $region32: #{tpu_custom_call.1} parent=27 // pred_fallthru
          _
      $region28: #{tpu_custom_call.1} parent=5 // pred_fallthru
        _
      %p165 = scmp.le.s32.totalorder 1, %s13
      %p166 = scmp.lt.s32.totalorder %s13, 3
      %p167 = pnand %p165, %p166
      %p168 = pneg %p167
      // Predicated region
      $region33: #{tpu_custom_call.1} parent=5 // pred_check
        _
      $region34: #{tpu_custom_call.1} parent=5 // pred_check_branch
        %170 = sbr.rel (%p167) target = $region36
      $region35: #{tpu_custom_call.1} parent=5 // pred_region
        %s171 = ssub.s32 %s13, 1
        %s172 = smul.u32 64, %s18
        %p173 = scmp.lt.s32.totalorder %s172, 127
        %s174 = scalar_select %p173, %s172, 127
        %s175 = smul.addr %s174, 8
        %s176 = scalar_lea.vmem %s0, %s175
        %p177 = pneg %p39
        %p178 = pneg %p36
        %p179 = pneg %p60
        %p180 = pneg %p57
        %p181 = pneg %p81
        %p182 = pneg %p78
        %p183 = pneg %p102
        %p184 = pneg %p99
        %p185 = pneg %p128
        %p186 = pneg %p125
        %s187 = sand.u32 %s115, 1
        %s188 = scalar_lea.sflag [#allocation3], %s187
        %s189 = sand.u32 %s115, 1
        %s190 = smul.addr %s189, 8
        %s191 = scalar_lea.vmem [#allocation2], %s190
        %s192 = smul.u32 64, %s18
        %p193 = scmp.lt.s32.totalorder %s192, 127
        %s194 = scalar_select %p193, %s192, 127
        %s195 = smul.addr %s194, 8
        %s196 = scalar_lea.vmem %s0, %s195
        %s197 = smul.u32 64, %s18
        %v198 = vld [vmem:[%s196] sm:$0xff]
        %v199 = vld [vmem:[%s196 + $0x8] sm:$0xff]
        %v200 = vld [vmem:[%s196 + $0x10] sm:$0xff]
        %v201 = vld [vmem:[%s196 + $0x18] sm:$0xff]
        %v202 = vld [vmem:[%s196 + $0x20] sm:$0xff]
        %v203 = vld [vmem:[%s196 + $0x28] sm:$0xff]
        %v204 = vld [vmem:[%s196 + $0x30] sm:$0xff]
        %v205 = vld [vmem:[%s196 + $0x38] sm:$0xff]
        %v206 = vld [vmem:[%s196 + $0x40] sm:$0xff]
        %v207 = vld [vmem:[%s196 + $0x48] sm:$0xff]
        %v208 = vld [vmem:[%s196 + $0x50] sm:$0xff]
        %v209 = vld [vmem:[%s196 + $0x58] sm:$0xff]
        %v210 = vld [vmem:[%s196 + $0x60] sm:$0xff]
        %v211 = vld [vmem:[%s196 + $0x68] sm:$0xff]
        %v212 = vld [vmem:[%s196 + $0x70] sm:$0xff]
        %v213 = vld [vmem:[%s196 + $0x78] sm:$0xff]
        %v214 = vld [vmem:[%s196 + $0x80] sm:$0xff]
        %v215 = vld [vmem:[%s196 + $0x88] sm:$0xff]
        %v216 = vld [vmem:[%s196 + $0x90] sm:$0xff]
        %v217 = vld [vmem:[%s196 + $0x98] sm:$0xff]
        %v218 = vld [vmem:[%s196 + $0xa0] sm:$0xff]
        %v219 = vld [vmem:[%s196 + $0xa8] sm:$0xff]
        %v220 = vld [vmem:[%s196 + $0xb0] sm:$0xff]
        %v221 = vld [vmem:[%s196 + $0xb8] sm:$0xff]
        %v222 = vld [vmem:[%s196 + $0xc0] sm:$0xff]
        %v223 = vld [vmem:[%s196 + $0xc8] sm:$0xff]
        %v224 = vld [vmem:[%s196 + $0xd0] sm:$0xff]
        %v225 = vld [vmem:[%s196 + $0xd8] sm:$0xff]
        %v226 = vld [vmem:[%s196 + $0xe0] sm:$0xff]
        %v227 = vld [vmem:[%s196 + $0xe8] sm:$0xff]
        %v228 = vld [vmem:[%s196 + $0xf0] sm:$0xff]
        %v229 = vld [vmem:[%s196 + $0xf8] sm:$0xff]
        %v230 = vld [vmem:[%s196 + $0x100] sm:$0xff]
        %v231 = vld [vmem:[%s196 + $0x108] sm:$0xff]
        %v232 = vld [vmem:[%s196 + $0x110] sm:$0xff]
        %v233 = vld [vmem:[%s196 + $0x118] sm:$0xff]
        %v234 = vld [vmem:[%s196 + $0x120] sm:$0xff]
        %v235 = vld [vmem:[%s196 + $0x128] sm:$0xff]
        %v236 = vld [vmem:[%s196 + $0x130] sm:$0xff]
        %v237 = vld [vmem:[%s196 + $0x138] sm:$0xff]
        %v238 = vld [vmem:[%s196 + $0x140] sm:$0xff]
        %v239 = vld [vmem:[%s196 + $0x148] sm:$0xff]
        %v240 = vld [vmem:[%s196 + $0x150] sm:$0xff]
        %v241 = vld [vmem:[%s196 + $0x158] sm:$0xff]
        %v242 = vld [vmem:[%s196 + $0x160] sm:$0xff]
        %v243 = vld [vmem:[%s196 + $0x168] sm:$0xff]
        %v244 = vld [vmem:[%s196 + $0x170] sm:$0xff]
        %v245 = vld [vmem:[%s196 + $0x178] sm:$0xff]
        %v246 = vld [vmem:[%s196 + $0x180] sm:$0xff]
        %v247 = vld [vmem:[%s196 + $0x188] sm:$0xff]
        %v248 = vld [vmem:[%s196 + $0x190] sm:$0xff]
        %v249 = vld [vmem:[%s196 + $0x198] sm:$0xff]
        %v250 = vld [vmem:[%s196 + $0x1a0] sm:$0xff]
        %v251 = vld [vmem:[%s196 + $0x1a8] sm:$0xff]
        %v252 = vld [vmem:[%s196 + $0x1b0] sm:$0xff]
        %v253 = vld [vmem:[%s196 + $0x1b8] sm:$0xff]
        %v254 = vld [vmem:[%s196 + $0x1c0] sm:$0xff]
        %v255 = vld [vmem:[%s196 + $0x1c8] sm:$0xff]
        %v256 = vld [vmem:[%s196 + $0x1d0] sm:$0xff]
        %v257 = vld [vmem:[%s196 + $0x1d8] sm:$0xff]
        %v258 = vld [vmem:[%s196 + $0x1e0] sm:$0xff]
        %v259 = vld [vmem:[%s196 + $0x1e8] sm:$0xff]
        %v260 = vld [vmem:[%s196 + $0x1f0] sm:$0xff]
        %v261 = vld [vmem:[%s196 + $0x1f8] sm:$0xff]
        %v262 = vld [vmem:[%s1] sm:$0xff]
        %v263 = vld [vmem:[%s1 + $0x8] sm:$0xff]
        %v264 = vld [vmem:[%s1 + $0x10] sm:$0xff]
        %v265 = vld [vmem:[%s1 + $0x18] sm:$0xff]
        %v266 = vld [vmem:[%s2] sm:$0x1]
        %v268 = vlaneseq
        %v269 = vshrl.u32 %v268, 7
        %v270 = vsub.s32 0, %v269
        %v271 = vrot.slane %v266, %v270
        %vm273 = vcmask 261120
        %v275 = vsel %vm273, %v198, 0
        %v278 = vsel %vm273, %v199, 0
        %v281 = vsel %vm273, %v200, 0
        %v284 = vsel %vm273, %v201, 0
        %v287 = vsel %vm273, %v202, 0
        %v290 = vsel %vm273, %v203, 0
        %v293 = vsel %vm273, %v204, 0
        %v296 = vsel %vm273, %v205, 0
        %v299 = vsel %vm273, %v206, 0
        %v302 = vsel %vm273, %v207, 0
        %v305 = vsel %vm273, %v208, 0
        %v308 = vsel %vm273, %v209, 0
        %v311 = vsel %vm273, %v210, 0
        %v314 = vsel %vm273, %v211, 0
        %v317 = vsel %vm273, %v212, 0
        %v320 = vsel %vm273, %v213, 0
        %v323 = vsel %vm273, %v214, 0
        %v326 = vsel %vm273, %v215, 0
        %v329 = vsel %vm273, %v216, 0
        %v332 = vsel %vm273, %v217, 0
        %v335 = vsel %vm273, %v218, 0
        %v338 = vsel %vm273, %v219, 0
        %v341 = vsel %vm273, %v220, 0
        %v344 = vsel %vm273, %v221, 0
        %v347 = vsel %vm273, %v222, 0
        %v350 = vsel %vm273, %v223, 0
        %v353 = vsel %vm273, %v224, 0
        %v356 = vsel %vm273, %v225, 0
        %v359 = vsel %vm273, %v226, 0
        %v362 = vsel %vm273, %v227, 0
        %v365 = vsel %vm273, %v228, 0
        %v368 = vsel %vm273, %v229, 0
        %v371 = vsel %vm273, %v230, 0
        %v374 = vsel %vm273, %v231, 0
        %v377 = vsel %vm273, %v232, 0
        %v380 = vsel %vm273, %v233, 0
        %v383 = vsel %vm273, %v234, 0
        %v386 = vsel %vm273, %v235, 0
        %v389 = vsel %vm273, %v236, 0
        %v392 = vsel %vm273, %v237, 0
        %v395 = vsel %vm273, %v238, 0
        %v398 = vsel %vm273, %v239, 0
        %v401 = vsel %vm273, %v240, 0
        %v404 = vsel %vm273, %v241, 0
        %v407 = vsel %vm273, %v242, 0
        %v410 = vsel %vm273, %v243, 0
        %v413 = vsel %vm273, %v244, 0
        %v416 = vsel %vm273, %v245, 0
        %v419 = vsel %vm273, %v246, 0
        %v422 = vsel %vm273, %v247, 0
        %v425 = vsel %vm273, %v248, 0
        %v428 = vsel %vm273, %v249, 0
        %v431 = vsel %vm273, %v250, 0
        %v434 = vsel %vm273, %v251, 0
        %v437 = vsel %vm273, %v252, 0
        %v440 = vsel %vm273, %v253, 0
        %v443 = vsel %vm273, %v254, 0
        %v446 = vsel %vm273, %v255, 0
        %v449 = vsel %vm273, %v256, 0
        %v452 = vsel %vm273, %v257, 0
        %v455 = vsel %vm273, %v258, 0
        %v458 = vsel %vm273, %v259, 0
        %v461 = vsel %vm273, %v260, 0
        %v464 = vsel %vm273, %v261, 0
        %466 = vmatprep.subr.mxu0 0.0
        %467 = vmatpush1.msra.mxu0 %v262
        %468 = vmatprep.subr.mxu0 0.0
        %469 = vmatpush1.msra.mxu0 %v263
        %470 = vmatprep.subr.mxu0 0.0
        %471 = vmatpush1.msra.mxu0 %v264
        %472 = vmatprep.subr.mxu0 0.0
        %473 = vmatpush1.msra.mxu0 %v265
        %474 = vmatprep.subr.mxu0 0.0
        %475 = vmatpush1.msra.mxu0 0.0
        %476 = vmatprep.subr.mxu0 0.0
        %477 = vmatpush1.msra.mxu0 0.0
        %478 = vmatprep.subr.mxu0 0.0
        %479 = vmatpush1.msra.mxu0 0.0
        %480 = vmatprep.subr.mxu0 0.0
        %481 = vmatpush1.msra.mxu0 0.0
        %482 = vmatprep.subr.mxu0 0.0
        %483 = vmatpush1.msra.mxu0 0.0
        %484 = vmatprep.subr.mxu0 0.0
        %485 = vmatpush1.msra.mxu0 0.0
        %486 = vmatprep.subr.mxu0 0.0
        %487 = vmatpush1.msra.mxu0 0.0
        %488 = vmatprep.subr.mxu0 0.0
        %489 = vmatpush1.msra.mxu0 0.0
        %490 = vmatprep.subr.mxu0 0.0
        %491 = vmatpush1.msra.mxu0 0.0
        %492 = vmatprep.subr.mxu0 0.0
        %493 = vmatpush1.msra.mxu0 0.0
        %494 = vmatprep.subr.mxu0 0.0
        %495 = vmatpush1.msra.mxu0 0.0
        %496 = vmatprep.subr.mxu0 0.0
        %497 = vmatpush1.msra.mxu0 0.0
        %498 = vmatprep.subr.mxu0 0.0
        %499 = vmatpush1.msra.mxu0 0.0
        %500 = vmatprep.subr.mxu0 0.0
        %501 = vmatpush1.msra.mxu0 0.0
        %502 = vmatprep.subr.mxu0 0.0
        %503 = vmatpush1.msra.mxu0 0.0
        %504 = vmatprep.subr.mxu0 0.0
        %505 = vmatpush1.msra.mxu0 0.0
        %506 = vmatprep.subr.mxu0 0.0
        %507 = vmatpush1.msra.mxu0 0.0
        %508 = vmatprep.subr.mxu0 0.0
        %509 = vmatpush1.msra.mxu0 0.0
        %510 = vmatprep.subr.mxu0 0.0
        %511 = vmatpush1.msra.mxu0 0.0
        %512 = vmatprep.subr.mxu0 0.0
        %513 = vmatpush1.msra.mxu0 0.0
        %514 = vmatprep.subr.mxu0 0.0
        %515 = vmatpush1.msra.mxu0 0.0
        %516 = vmatprep.subr.mxu0 0.0
        %517 = vmatpush1.msra.mxu0 0.0
        %518 = vmatprep.subr.mxu0 0.0
        %519 = vmatpush1.msra.mxu0 0.0
        %520 = vmatprep.subr.mxu0 0.0
        %521 = vmatpush1.msra.mxu0 0.0
        %522 = vmatprep.subr.mxu0 0.0
        %523 = vmatpush1.msra.mxu0 0.0
        %524 = vmatprep.subr.mxu0 0.0
        %525 = vmatpush1.msra.mxu0 0.0
        %526 = vmatprep.subr.mxu0 0.0
        %527 = vmatpush1.msra.mxu0 0.0
        %528 = vmatprep.subr.mxu0 0.0
        %529 = vmatpush1.msra.mxu0 0.0
        %530 = vmatprep.mubr.f32.mxu0 0.0
        %531 = vmatmul.mubr.f32.gmra.mrb[0].mxu0 %v275
        %v532 = vpop.f32.mrb[0].mxu0
        %v533 = vadd.f32 %v271, %v532
        %v534 = vpop.f32.mrb[0].mxu0
        %535 = vmatprep.mubr.f32.mxu0 0.0
        %536 = vmatmul.mubr.f32.gmra.mrb[0].mxu0 %v278
        %v537 = vpop.f32.mrb[0].mxu0
        %v538 = vadd.f32 %v271, %v537
        %v539 = vpop.f32.mrb[0].mxu0
        %540 = vmatprep.mubr.f32.mxu0 0.0
        %541 = vmatmul.mubr.f32.gmra.mrb[0].mxu0 %v281
        %v542 = vpop.f32.mrb[0].mxu0
        %v543 = vadd.f32 %v271, %v542
        %v544 = vpop.f32.mrb[0].mxu0
        %545 = vmatprep.mubr.f32.mxu0 0.0
        %546 = vmatmul.mubr.f32.gmra.mrb[0].mxu0 %v284
        %v547 = vpop.f32.mrb[0].mxu0
        %v548 = vadd.f32 %v271, %v547
        %v549 = vpop.f32.mrb[0].mxu0
        %550 = vmatprep.mubr.f32.mxu0 0.0
        %551 = vmatmul.mubr.f32.gmra.mrb[0].mxu0 %v287
        %v552 = vpop.f32.mrb[0].mxu0
        %v553 = vadd.f32 %v271, %v552
        %v554 = vpop.f32.mrb[0].mxu0
        %555 = vmatprep.mubr.f32.mxu0 0.0
        %556 = vmatmul.mubr.f32.gmra.mrb[0].mxu0 %v290
        %v557 = vpop.f32.mrb[0].mxu0
        %v558 = vadd.f32 %v271, %v557
        %v559 = vpop.f32.mrb[0].mxu0
        %560 = vmatprep.mubr.f32.mxu0 0.0
        %561 = vmatmul.mubr.f32.gmra.mrb[0].mxu0 %v293
        %v562 = vpop.f32.mrb[0].mxu0
        %v563 = vadd.f32 %v271, %v562
        %v564 = vpop.f32.mrb[0].mxu0
        %565 = vmatprep.mubr.f32.mxu0 0.0
        %566 = vmatmul.mubr.f32.gmra.mrb[0].mxu0 %v296
        %v567 = vpop.f32.mrb[0].mxu0
        %v568 = vadd.f32 %v271, %v567
        %v569 = vpop.f32.mrb[0].mxu0
        %570 = vmatprep.mubr.f32.mxu0 0.0
        %571 = vmatmul.mubr.f32.gmra.mrb[0].mxu0 %v299
        %v572 = vpop.f32.mrb[0].mxu0
        %v573 = vadd.f32 %v271, %v572
        %v574 = vpop.f32.mrb[0].mxu0
        %575 = vmatprep.mubr.f32.mxu0 0.0
        %576 = vmatmul.mubr.f32.gmra.mrb[0].mxu0 %v302
        %v577 = vpop.f32.mrb[0].mxu0
        %v578 = vadd.f32 %v271, %v577
        %v579 = vpop.f32.mrb[0].mxu0
        %580 = vmatprep.mubr.f32.mxu0 0.0
        %581 = vmatmul.mubr.f32.gmra.mrb[0].mxu0 %v305
        %v582 = vpop.f32.mrb[0].mxu0
        %v583 = vadd.f32 %v271, %v582
        %v584 = vpop.f32.mrb[0].mxu0
        %585 = vmatprep.mubr.f32.mxu0 0.0
        %586 = vmatmul.mubr.f32.gmra.mrb[0].mxu0 %v308
        %v587 = vpop.f32.mrb[0].mxu0
        %v588 = vadd.f32 %v271, %v587
        %v589 = vpop.f32.mrb[0].mxu0
        %590 = vmatprep.mubr.f32.mxu0 0.0
        %591 = vmatmul.mubr.f32.gmra.mrb[0].mxu0 %v311
        %v592 = vpop.f32.mrb[0].mxu0
        %v593 = vadd.f32 %v271, %v592
        %v594 = vpop.f32.mrb[0].mxu0
        %595 = vmatprep.mubr.f32.mxu0 0.0
        %596 = vmatmul.mubr.f32.gmra.mrb[0].mxu0 %v314
        %v597 = vpop.f32.mrb[0].mxu0
        %v598 = vadd.f32 %v271, %v597
        %v599 = vpop.f32.mrb[0].mxu0
        %600 = vmatprep.mubr.f32.mxu0 0.0
        %601 = vmatmul.mubr.f32.gmra.mrb[0].mxu0 %v317
        %v602 = vpop.f32.mrb[0].mxu0
        %v603 = vadd.f32 %v271, %v602
        %v604 = vpop.f32.mrb[0].mxu0
        %605 = vmatprep.mubr.f32.mxu0 0.0
        %606 = vmatmul.mubr.f32.gmra.mrb[0].mxu0 %v320
        %v607 = vpop.f32.mrb[0].mxu0
        %v608 = vadd.f32 %v271, %v607
        %v609 = vpop.f32.mrb[0].mxu0
        %610 = vmatprep.mubr.f32.mxu0 0.0
        %611 = vmatmul.mubr.f32.gmra.mrb[0].mxu0 %v323
        %v612 = vpop.f32.mrb[0].mxu0
        %v613 = vadd.f32 %v271, %v612
        %v614 = vpop.f32.mrb[0].mxu0
        %615 = vmatprep.mubr.f32.mxu0 0.0
        %616 = vmatmul.mubr.f32.gmra.mrb[0].mxu0 %v326
        %v617 = vpop.f32.mrb[0].mxu0
        %v618 = vadd.f32 %v271, %v617
        %v619 = vpop.f32.mrb[0].mxu0
        %620 = vmatprep.mubr.f32.mxu0 0.0
        %621 = vmatmul.mubr.f32.gmra.mrb[0].mxu0 %v329
        %v622 = vpop.f32.mrb[0].mxu0
        %v623 = vadd.f32 %v271, %v622
        %v624 = vpop.f32.mrb[0].mxu0
        %625 = vmatprep.mubr.f32.mxu0 0.0
        %626 = vmatmul.mubr.f32.gmra.mrb[0].mxu0 %v332
        %v627 = vpop.f32.mrb[0].mxu0
        %v628 = vadd.f32 %v271, %v627
        %v629 = vpop.f32.mrb[0].mxu0
        %630 = vmatprep.mubr.f32.mxu0 0.0
        %631 = vmatmul.mubr.f32.gmra.mrb[0].mxu0 %v335
        %v632 = vpop.f32.mrb[0].mxu0
        %v633 = vadd.f32 %v271, %v632
        %v634 = vpop.f32.mrb[0].mxu0
        %635 = vmatprep.mubr.f32.mxu0 0.0
        %636 = vmatmul.mubr.f32.gmra.mrb[0].mxu0 %v338
        %v637 = vpop.f32.mrb[0].mxu0
        %v638 = vadd.f32 %v271, %v637
        %v639 = vpop.f32.mrb[0].mxu0
        %640 = vmatprep.mubr.f32.mxu0 0.0
        %641 = vmatmul.mubr.f32.gmra.mrb[0].mxu0 %v341
        %v642 = vpop.f32.mrb[0].mxu0
        %v643 = vadd.f32 %v271, %v642
        %v644 = vpop.f32.mrb[0].mxu0
        %645 = vmatprep.mubr.f32.mxu0 0.0
        %646 = vmatmul.mubr.f32.gmra.mrb[0].mxu0 %v344
        %v647 = vpop.f32.mrb[0].mxu0
        %v648 = vadd.f32 %v271, %v647
        %v649 = vpop.f32.mrb[0].mxu0
        %650 = vmatprep.mubr.f32.mxu0 0.0
        %651 = vmatmul.mubr.f32.gmra.mrb[0].mxu0 %v347
        %v652 = vpop.f32.mrb[0].mxu0
        %v653 = vadd.f32 %v271, %v652
        %v654 = vpop.f32.mrb[0].mxu0
        %655 = vmatprep.mubr.f32.mxu0 0.0
        %656 = vmatmul.mubr.f32.gmra.mrb[0].mxu0 %v350
        %v657 = vpop.f32.mrb[0].mxu0
        %v658 = vadd.f32 %v271, %v657
        %v659 = vpop.f32.mrb[0].mxu0
        %660 = vmatprep.mubr.f32.mxu0 0.0
        %661 = vmatmul.mubr.f32.gmra.mrb[0].mxu0 %v353
        %v662 = vpop.f32.mrb[0].mxu0
        %v663 = vadd.f32 %v271, %v662
        %v664 = vpop.f32.mrb[0].mxu0
        %665 = vmatprep.mubr.f32.mxu0 0.0
        %666 = vmatmul.mubr.f32.gmra.mrb[0].mxu0 %v356
        %v667 = vpop.f32.mrb[0].mxu0
        %v668 = vadd.f32 %v271, %v667
        %v669 = vpop.f32.mrb[0].mxu0
        %670 = vmatprep.mubr.f32.mxu0 0.0
        %671 = vmatmul.mubr.f32.gmra.mrb[0].mxu0 %v359
        %v672 = vpop.f32.mrb[0].mxu0
        %v673 = vadd.f32 %v271, %v672
        %v674 = vpop.f32.mrb[0].mxu0
        %675 = vmatprep.mubr.f32.mxu0 0.0
        %676 = vmatmul.mubr.f32.gmra.mrb[0].mxu0 %v362
        %v677 = vpop.f32.mrb[0].mxu0
        %v678 = vadd.f32 %v271, %v677
        %v679 = vpop.f32.mrb[0].mxu0
        %680 = vmatprep.mubr.f32.mxu0 0.0
        %681 = vmatmul.mubr.f32.gmra.mrb[0].mxu0 %v365
        %v682 = vpop.f32.mrb[0].mxu0
        %v683 = vadd.f32 %v271, %v682
        %v684 = vpop.f32.mrb[0].mxu0
        %685 = vmatprep.mubr.f32.mxu0 0.0
        %686 = vmatmul.mubr.f32.gmra.mrb[0].mxu0 %v368
        %v687 = vpop.f32.mrb[0].mxu0
        %v688 = vadd.f32 %v271, %v687
        %v689 = vpop.f32.mrb[0].mxu0
        %690 = vmatprep.mubr.f32.mxu0 0.0
        %691 = vmatmul.mubr.f32.gmra.mrb[0].mxu0 %v371
        %v692 = vpop.f32.mrb[0].mxu0
        %v693 = vadd.f32 %v271, %v692
        %v694 = vpop.f32.mrb[0].mxu0
        %695 = vmatprep.mubr.f32.mxu0 0.0
        %696 = vmatmul.mubr.f32.gmra.mrb[0].mxu0 %v374
        %v697 = vpop.f32.mrb[0].mxu0
        %v698 = vadd.f32 %v271, %v697
        %v699 = vpop.f32.mrb[0].mxu0
        %700 = vmatprep.mubr.f32.mxu0 0.0
        %701 = vmatmul.mubr.f32.gmra.mrb[0].mxu0 %v377
        %v702 = vpop.f32.mrb[0].mxu0
        %v703 = vadd.f32 %v271, %v702
        %v704 = vpop.f32.mrb[0].mxu0
        %705 = vmatprep.mubr.f32.mxu0 0.0
        %706 = vmatmul.mubr.f32.gmra.mrb[0].mxu0 %v380
        %v707 = vpop.f32.mrb[0].mxu0
        %v708 = vadd.f32 %v271, %v707
        %v709 = vpop.f32.mrb[0].mxu0
        %710 = vmatprep.mubr.f32.mxu0 0.0
        %711 = vmatmul.mubr.f32.gmra.mrb[0].mxu0 %v383
        %v712 = vpop.f32.mrb[0].mxu0
        %v713 = vadd.f32 %v271, %v712
        %v714 = vpop.f32.mrb[0].mxu0
        %715 = vmatprep.mubr.f32.mxu0 0.0
        %716 = vmatmul.mubr.f32.gmra.mrb[0].mxu0 %v386
        %v717 = vpop.f32.mrb[0].mxu0
        %v718 = vadd.f32 %v271, %v717
        %v719 = vpop.f32.mrb[0].mxu0
        %720 = vmatprep.mubr.f32.mxu0 0.0
        %721 = vmatmul.mubr.f32.gmra.mrb[0].mxu0 %v389
        %v722 = vpop.f32.mrb[0].mxu0
        %v723 = vadd.f32 %v271, %v722
        %v724 = vpop.f32.mrb[0].mxu0
        %725 = vmatprep.mubr.f32.mxu0 0.0
        %726 = vmatmul.mubr.f32.gmra.mrb[0].mxu0 %v392
        %v727 = vpop.f32.mrb[0].mxu0
        %v728 = vadd.f32 %v271, %v727
        %v729 = vpop.f32.mrb[0].mxu0
        %730 = vmatprep.mubr.f32.mxu0 0.0
        %731 = vmatmul.mubr.f32.gmra.mrb[0].mxu0 %v395
        %v732 = vpop.f32.mrb[0].mxu0
        %v733 = vadd.f32 %v271, %v732
        %v734 = vpop.f32.mrb[0].mxu0
        %735 = vmatprep.mubr.f32.mxu0 0.0
        %736 = vmatmul.mubr.f32.gmra.mrb[0].mxu0 %v398
        %v737 = vpop.f32.mrb[0].mxu0
        %v738 = vadd.f32 %v271, %v737
        %v739 = vpop.f32.mrb[0].mxu0
        %740 = vmatprep.mubr.f32.mxu0 0.0
        %741 = vmatmul.mubr.f32.gmra.mrb[0].mxu0 %v401
        %v742 = vpop.f32.mrb[0].mxu0
        %v743 = vadd.f32 %v271, %v742
        %v744 = vpop.f32.mrb[0].mxu0
        %745 = vmatprep.mubr.f32.mxu0 0.0
        %746 = vmatmul.mubr.f32.gmra.mrb[0].mxu0 %v404
        %v747 = vpop.f32.mrb[0].mxu0
        %v748 = vadd.f32 %v271, %v747
        %v749 = vpop.f32.mrb[0].mxu0
        %750 = vmatprep.mubr.f32.mxu0 0.0
        %751 = vmatmul.mubr.f32.gmra.mrb[0].mxu0 %v407
        %v752 = vpop.f32.mrb[0].mxu0
        %v753 = vadd.f32 %v271, %v752
        %v754 = vpop.f32.mrb[0].mxu0
        %755 = vmatprep.mubr.f32.mxu0 0.0
        %756 = vmatmul.mubr.f32.gmra.mrb[0].mxu0 %v410
        %v757 = vpop.f32.mrb[0].mxu0
        %v758 = vadd.f32 %v271, %v757
        %v759 = vpop.f32.mrb[0].mxu0
        %760 = vmatprep.mubr.f32.mxu0 0.0
        %761 = vmatmul.mubr.f32.gmra.mrb[0].mxu0 %v413
        %v762 = vpop.f32.mrb[0].mxu0
        %v763 = vadd.f32 %v271, %v762
        %v764 = vpop.f32.mrb[0].mxu0
        %765 = vmatprep.mubr.f32.mxu0 0.0
        %766 = vmatmul.mubr.f32.gmra.mrb[0].mxu0 %v416
        %v767 = vpop.f32.mrb[0].mxu0
        %v768 = vadd.f32 %v271, %v767
        %v769 = vpop.f32.mrb[0].mxu0
        %770 = vmatprep.mubr.f32.mxu0 0.0
        %771 = vmatmul.mubr.f32.gmra.mrb[0].mxu0 %v419
        %v772 = vpop.f32.mrb[0].mxu0
        %v773 = vadd.f32 %v271, %v772
        %v774 = vpop.f32.mrb[0].mxu0
        %775 = vmatprep.mubr.f32.mxu0 0.0
        %776 = vmatmul.mubr.f32.gmra.mrb[0].mxu0 %v422
        %v777 = vpop.f32.mrb[0].mxu0
        %v778 = vadd.f32 %v271, %v777
        %v779 = vpop.f32.mrb[0].mxu0
        %780 = vmatprep.mubr.f32.mxu0 0.0
        %781 = vmatmul.mubr.f32.gmra.mrb[0].mxu0 %v425
        %v782 = vpop.f32.mrb[0].mxu0
        %v783 = vadd.f32 %v271, %v782
        %v784 = vpop.f32.mrb[0].mxu0
        %785 = vmatprep.mubr.f32.mxu0 0.0
        %786 = vmatmul.mubr.f32.gmra.mrb[0].mxu0 %v428
        %v787 = vpop.f32.mrb[0].mxu0
        %v788 = vadd.f32 %v271, %v787
        %v789 = vpop.f32.mrb[0].mxu0
        %790 = vmatprep.mubr.f32.mxu0 0.0
        %791 = vmatmul.mubr.f32.gmra.mrb[0].mxu0 %v431
        %v792 = vpop.f32.mrb[0].mxu0
        %v793 = vadd.f32 %v271, %v792
        %v794 = vpop.f32.mrb[0].mxu0
        %795 = vmatprep.mubr.f32.mxu0 0.0
        %796 = vmatmul.mubr.f32.gmra.mrb[0].mxu0 %v434
        %v797 = vpop.f32.mrb[0].mxu0
        %v798 = vadd.f32 %v271, %v797
        %v799 = vpop.f32.mrb[0].mxu0
        %800 = vmatprep.mubr.f32.mxu0 0.0
        %801 = vmatmul.mubr.f32.gmra.mrb[0].mxu0 %v437
        %v802 = vpop.f32.mrb[0].mxu0
        %v803 = vadd.f32 %v271, %v802
        %v804 = vpop.f32.mrb[0].mxu0
        %805 = vmatprep.mubr.f32.mxu0 0.0
        %806 = vmatmul.mubr.f32.gmra.mrb[0].mxu0 %v440
        %v807 = vpop.f32.mrb[0].mxu0
        %v808 = vadd.f32 %v271, %v807
        %v809 = vpop.f32.mrb[0].mxu0
        %810 = vmatprep.mubr.f32.mxu0 0.0
        %811 = vmatmul.mubr.f32.gmra.mrb[0].mxu0 %v443
        %v812 = vpop.f32.mrb[0].mxu0
        %v813 = vadd.f32 %v271, %v812
        %v814 = vpop.f32.mrb[0].mxu0
        %815 = vmatprep.mubr.f32.mxu0 0.0
        %816 = vmatmul.mubr.f32.gmra.mrb[0].mxu0 %v446
        %v817 = vpop.f32.mrb[0].mxu0
        %v818 = vadd.f32 %v271, %v817
        %v819 = vpop.f32.mrb[0].mxu0
        %820 = vmatprep.mubr.f32.mxu0 0.0
        %821 = vmatmul.mubr.f32.gmra.mrb[0].mxu0 %v449
        %v822 = vpop.f32.mrb[0].mxu0
        %v823 = vadd.f32 %v271, %v822
        %v824 = vpop.f32.mrb[0].mxu0
        %825 = vmatprep.mubr.f32.mxu0 0.0
        %826 = vmatmul.mubr.f32.gmra.mrb[0].mxu0 %v452
        %v827 = vpop.f32.mrb[0].mxu0
        %v828 = vadd.f32 %v271, %v827
        %v829 = vpop.f32.mrb[0].mxu0
        %830 = vmatprep.mubr.f32.mxu0 0.0
        %831 = vmatmul.mubr.f32.gmra.mrb[0].mxu0 %v455
        %v832 = vpop.f32.mrb[0].mxu0
        %v833 = vadd.f32 %v271, %v832
        %v834 = vpop.f32.mrb[0].mxu0
        %835 = vmatprep.mubr.f32.mxu0 0.0
        %836 = vmatmul.mubr.f32.gmra.mrb[0].mxu0 %v458
        %v837 = vpop.f32.mrb[0].mxu0
        %v838 = vadd.f32 %v271, %v837
        %v839 = vpop.f32.mrb[0].mxu0
        %840 = vmatprep.mubr.f32.mxu0 0.0
        %841 = vmatmul.mubr.f32.gmra.mrb[0].mxu0 %v461
        %v842 = vpop.f32.mrb[0].mxu0
        %v843 = vadd.f32 %v271, %v842
        %v844 = vpop.f32.mrb[0].mxu0
        %845 = vmatprep.mubr.f32.mxu0 0.0
        %846 = vmatmul.mubr.f32.gmra.mrb[0].mxu0 %v464
        %v847 = vpop.f32.mrb[0].mxu0
        %v848 = vadd.f32 %v271, %v847
        %v849 = vpop.f32.mrb[0].mxu0
        %850 = vdwg.mxu0
        %v851 = vmax.f32 %v533, 0.0
        %v852 = vmax.f32 %v538, 0.0
        %v853 = vmax.f32 %v543, 0.0
        %v854 = vmax.f32 %v548, 0.0
        %v855 = vmax.f32 %v553, 0.0
        %v856 = vmax.f32 %v558, 0.0
        %v857 = vmax.f32 %v563, 0.0
        %v858 = vmax.f32 %v568, 0.0
        %v859 = vmax.f32 %v573, 0.0
        %v860 = vmax.f32 %v578, 0.0
        %v861 = vmax.f32 %v583, 0.0
        %v862 = vmax.f32 %v588, 0.0
        %v863 = vmax.f32 %v593, 0.0
        %v864 = vmax.f32 %v598, 0.0
        %v865 = vmax.f32 %v603, 0.0
        %v866 = vmax.f32 %v608, 0.0
        %v867 = vmax.f32 %v613, 0.0
        %v868 = vmax.f32 %v618, 0.0
        %v869 = vmax.f32 %v623, 0.0
        %v870 = vmax.f32 %v628, 0.0
        %v871 = vmax.f32 %v633, 0.0
        %v872 = vmax.f32 %v638, 0.0
        %v873 = vmax.f32 %v643, 0.0
        %v874 = vmax.f32 %v648, 0.0
        %v875 = vmax.f32 %v653, 0.0
        %v876 = vmax.f32 %v658, 0.0
        %v877 = vmax.f32 %v663, 0.0
        %v878 = vmax.f32 %v668, 0.0
        %v879 = vmax.f32 %v673, 0.0
        %v880 = vmax.f32 %v678, 0.0
        %v881 = vmax.f32 %v683, 0.0
        %v882 = vmax.f32 %v688, 0.0
        %v883 = vmax.f32 %v693, 0.0
        %v884 = vmax.f32 %v698, 0.0
        %v885 = vmax.f32 %v703, 0.0
        %v886 = vmax.f32 %v708, 0.0
        %v887 = vmax.f32 %v713, 0.0
        %v888 = vmax.f32 %v718, 0.0
        %v889 = vmax.f32 %v723, 0.0
        %v890 = vmax.f32 %v728, 0.0
        %v891 = vmax.f32 %v733, 0.0
        %v892 = vmax.f32 %v738, 0.0
        %v893 = vmax.f32 %v743, 0.0
        %v894 = vmax.f32 %v748, 0.0
        %v895 = vmax.f32 %v753, 0.0
        %v896 = vmax.f32 %v758, 0.0
        %v897 = vmax.f32 %v763, 0.0
        %v898 = vmax.f32 %v768, 0.0
        %v899 = vmax.f32 %v773, 0.0
        %v900 = vmax.f32 %v778, 0.0
        %v901 = vmax.f32 %v783, 0.0
        %v902 = vmax.f32 %v788, 0.0
        %v903 = vmax.f32 %v793, 0.0
        %v904 = vmax.f32 %v798, 0.0
        %v905 = vmax.f32 %v803, 0.0
        %v906 = vmax.f32 %v808, 0.0
        %v907 = vmax.f32 %v813, 0.0
        %v908 = vmax.f32 %v818, 0.0
        %v909 = vmax.f32 %v823, 0.0
        %v910 = vmax.f32 %v828, 0.0
        %v911 = vmax.f32 %v833, 0.0
        %v912 = vmax.f32 %v838, 0.0
        %v913 = vmax.f32 %v843, 0.0
        %v914 = vmax.f32 %v848, 0.0
        %v915 = vld [vmem:[%s3] sm:$0xff]
        %v916 = vld [vmem:[%s3 + $0x8] sm:$0xff]
        %v917 = vld [vmem:[%s3 + $0x10] sm:$0xff]
        %v918 = vld [vmem:[%s3 + $0x18] sm:$0xff]
        %919 = vmatprep.subr.mxu0 0.0
        %920 = vmatpush1.msra.mxu0 %v851
        %921 = vmatprep.subr.mxu0 0.0
        %922 = vmatpush1.msra.mxu0 %v852
        %923 = vmatprep.subr.mxu0 0.0
        %924 = vmatpush1.msra.mxu0 %v853
        %925 = vmatprep.subr.mxu0 0.0
        %926 = vmatpush1.msra.mxu0 %v854
        %927 = vmatprep.subr.mxu0 0.0
        %928 = vmatpush1.msra.mxu0 %v855
        %929 = vmatprep.subr.mxu0 0.0
        %930 = vmatpush1.msra.mxu0 %v856
        %931 = vmatprep.subr.mxu0 0.0
        %932 = vmatpush1.msra.mxu0 %v857
        %933 = vmatprep.subr.mxu0 0.0
        %934 = vmatpush1.msra.mxu0 %v858
        %935 = vmatprep.subr.mxu0 0.0
        %936 = vmatpush1.msra.mxu0 %v859
        %937 = vmatprep.subr.mxu0 0.0
        %938 = vmatpush1.msra.mxu0 %v860
        %939 = vmatprep.subr.mxu0 0.0
        %940 = vmatpush1.msra.mxu0 %v861
        %941 = vmatprep.subr.mxu0 0.0
        %942 = vmatpush1.msra.mxu0 %v862
        %943 = vmatprep.subr.mxu0 0.0
        %944 = vmatpush1.msra.mxu0 %v863
        %945 = vmatprep.subr.mxu0 0.0
        %946 = vmatpush1.msra.mxu0 %v864
        %947 = vmatprep.subr.mxu0 0.0
        %948 = vmatpush1.msra.mxu0 %v865
        %949 = vmatprep.subr.mxu0 0.0
        %950 = vmatpush1.msra.mxu0 %v866
        %951 = vmatprep.subr.mxu0 0.0
        %952 = vmatpush1.msra.mxu0 %v867
        %953 = vmatprep.subr.mxu0 0.0
        %954 = vmatpush1.msra.mxu0 %v868
        %955 = vmatprep.subr.mxu0 0.0
        %956 = vmatpush1.msra.mxu0 %v869
        %957 = vmatprep.subr.mxu0 0.0
        %958 = vmatpush1.msra.mxu0 %v870
        %959 = vmatprep.subr.mxu0 0.0
        %960 = vmatpush1.msra.mxu0 %v871
        %961 = vmatprep.subr.mxu0 0.0
        %962 = vmatpush1.msra.mxu0 %v872
        %963 = vmatprep.subr.mxu0 0.0
        %964 = vmatpush1.msra.mxu0 %v873
        %965 = vmatprep.subr.mxu0 0.0
        %966 = vmatpush1.msra.mxu0 %v874
        %967 = vmatprep.subr.mxu0 0.0
        %968 = vmatpush1.msra.mxu0 %v875
        %969 = vmatprep.subr.mxu0 0.0
        %970 = vmatpush1.msra.mxu0 %v876
        %971 = vmatprep.subr.mxu0 0.0
        %972 = vmatpush1.msra.mxu0 %v877
        %973 = vmatprep.subr.mxu0 0.0
        %974 = vmatpush1.msra.mxu0 %v878
        %975 = vmatprep.subr.mxu0 0.0
        %976 = vmatpush1.msra.mxu0 %v879
        %977 = vmatprep.subr.mxu0 0.0
        %978 = vmatpush1.msra.mxu0 %v880
        %979 = vmatprep.subr.mxu0 0.0
        %980 = vmatpush1.msra.mxu0 %v881
        %981 = vmatprep.subr.mxu0 0.0
        %982 = vmatpush1.msra.mxu0 %v882
        %983 = vmatprep.mubr.f32.mxu0 %v916
        %984 = vmatmul.mubr.f32.gmra.mrb[0].mxu0 %v915
        %v985 = vpop.f32.mrb[0].mxu0
        %v986 = vadd.f32 0.0, %v985
        %v987 = vpop.f32.mrb[0].mxu0
        %988 = vdwg.mxu0
        %989 = vmatprep.subr.mxu0 0.0
        %990 = vmatpush1.msra.mxu0 %v883
        %991 = vmatprep.subr.mxu0 0.0
        %992 = vmatpush1.msra.mxu0 %v884
        %993 = vmatprep.subr.mxu0 0.0
        %994 = vmatpush1.msra.mxu0 %v885
        %995 = vmatprep.subr.mxu0 0.0
        %996 = vmatpush1.msra.mxu0 %v886
        %997 = vmatprep.subr.mxu0 0.0
        %998 = vmatpush1.msra.mxu0 %v887
        %999 = vmatprep.subr.mxu0 0.0
        %1000 = vmatpush1.msra.mxu0 %v888
        %1001 = vmatprep.subr.mxu0 0.0
        %1002 = vmatpush1.msra.mxu0 %v889
        %1003 = vmatprep.subr.mxu0 0.0
        %1004 = vmatpush1.msra.mxu0 %v890
        %1005 = vmatprep.subr.mxu0 0.0
        %1006 = vmatpush1.msra.mxu0 %v891
        %1007 = vmatprep.subr.mxu0 0.0
        %1008 = vmatpush1.msra.mxu0 %v892
        %1009 = vmatprep.subr.mxu0 0.0
        %1010 = vmatpush1.msra.mxu0 %v893
        %1011 = vmatprep.subr.mxu0 0.0
        %1012 = vmatpush1.msra.mxu0 %v894
        %1013 = vmatprep.subr.mxu0 0.0
        %1014 = vmatpush1.msra.mxu0 %v895
        %1015 = vmatprep.subr.mxu0 0.0
        %1016 = vmatpush1.msra.mxu0 %v896
        %1017 = vmatprep.subr.mxu0 0.0
        %1018 = vmatpush1.msra.mxu0 %v897
        %1019 = vmatprep.subr.mxu0 0.0
        %1020 = vmatpush1.msra.mxu0 %v898
        %1021 = vmatprep.subr.mxu0 0.0
        %1022 = vmatpush1.msra.mxu0 %v899
        %1023 = vmatprep.subr.mxu0 0.0
        %1024 = vmatpush1.msra.mxu0 %v900
        %1025 = vmatprep.subr.mxu0 0.0
        %1026 = vmatpush1.msra.mxu0 %v901
        %1027 = vmatprep.subr.mxu0 0.0
        %1028 = vmatpush1.msra.mxu0 %v902
        %1029 = vmatprep.subr.mxu0 0.0
        %1030 = vmatpush1.msra.mxu0 %v903
        %1031 = vmatprep.subr.mxu0 0.0
        %1032 = vmatpush1.msra.mxu0 %v904
        %1033 = vmatprep.subr.mxu0 0.0
        %1034 = vmatpush1.msra.mxu0 %v905
        %1035 = vmatprep.subr.mxu0 0.0
        %1036 = vmatpush1.msra.mxu0 %v906
        %1037 = vmatprep.subr.mxu0 0.0
        %1038 = vmatpush1.msra.mxu0 %v907
        %1039 = vmatprep.subr.mxu0 0.0
        %1040 = vmatpush1.msra.mxu0 %v908
        %1041 = vmatprep.subr.mxu0 0.0
        %1042 = vmatpush1.msra.mxu0 %v909
        %1043 = vmatprep.subr.mxu0 0.0
        %1044 = vmatpush1.msra.mxu0 %v910
        %1045 = vmatprep.subr.mxu0 0.0
        %1046 = vmatpush1.msra.mxu0 %v911
        %1047 = vmatprep.subr.mxu0 0.0
        %1048 = vmatpush1.msra.mxu0 %v912
        %1049 = vmatprep.subr.mxu0 0.0
        %1050 = vmatpush1.msra.mxu0 %v913
        %1051 = vmatprep.subr.mxu0 0.0
        %1052 = vmatpush1.msra.mxu0 %v914
        %1053 = vmatprep.mubr.f32.mxu0 %v918
        %1054 = vmatmul.mubr.f32.gmra.mrb[0].mxu0 %v917
        %v1055 = vpop.f32.mrb[0].mxu0
        %v1056 = vadd.f32 %v986, %v1055
        %v1057 = vpop.f32.mrb[0].mxu0
        %1058 = vdwg.mxu0
        %v1059 = vmul.f32 %v851, %v851
        %v1060 = vmul.f32 %v852, %v852
        %v1061 = vmul.f32 %v853, %v853
        %v1062 = vmul.f32 %v854, %v854
        %v1063 = vmul.f32 %v855, %v855
        %v1064 = vmul.f32 %v856, %v856
        %v1065 = vmul.f32 %v857, %v857
        %v1066 = vmul.f32 %v858, %v858
        %v1067 = vmul.f32 %v859, %v859
        %v1068 = vmul.f32 %v860, %v860
        %v1069 = vmul.f32 %v861, %v861
        %v1070 = vmul.f32 %v862, %v862
        %v1071 = vmul.f32 %v863, %v863
        %v1072 = vmul.f32 %v864, %v864
        %v1073 = vmul.f32 %v865, %v865
        %v1074 = vmul.f32 %v866, %v866
        %v1075 = vmul.f32 %v867, %v867
        %v1076 = vmul.f32 %v868, %v868
        %v1077 = vmul.f32 %v869, %v869
        %v1078 = vmul.f32 %v870, %v870
        %v1079 = vmul.f32 %v871, %v871
        %v1080 = vmul.f32 %v872, %v872
        %v1081 = vmul.f32 %v873, %v873
        %v1082 = vmul.f32 %v874, %v874
        %v1083 = vmul.f32 %v875, %v875
        %v1084 = vmul.f32 %v876, %v876
        %v1085 = vmul.f32 %v877, %v877
        %v1086 = vmul.f32 %v878, %v878
        %v1087 = vmul.f32 %v879, %v879
        %v1088 = vmul.f32 %v880, %v880
        %v1089 = vmul.f32 %v881, %v881
        %v1090 = vmul.f32 %v882, %v882
        %v1091 = vmul.f32 %v883, %v883
        %v1092 = vmul.f32 %v884, %v884
        %v1093 = vmul.f32 %v885, %v885
        %v1094 = vmul.f32 %v886, %v886
        %v1095 = vmul.f32 %v887, %v887
        %v1096 = vmul.f32 %v888, %v888
        %v1097 = vmul.f32 %v889, %v889
        %v1098 = vmul.f32 %v890, %v890
        %v1099 = vmul.f32 %v891, %v891
        %v1100 = vmul.f32 %v892, %v892
        %v1101 = vmul.f32 %v893, %v893
        %v1102 = vmul.f32 %v894, %v894
        %v1103 = vmul.f32 %v895, %v895
        %v1104 = vmul.f32 %v896, %v896
        %v1105 = vmul.f32 %v897, %v897
        %v1106 = vmul.f32 %v898, %v898
        %v1107 = vmul.f32 %v899, %v899
        %v1108 = vmul.f32 %v900, %v900
        %v1109 = vmul.f32 %v901, %v901
        %v1110 = vmul.f32 %v902, %v902
        %v1111 = vmul.f32 %v903, %v903
        %v1112 = vmul.f32 %v904, %v904
        %v1113 = vmul.f32 %v905, %v905
        %v1114 = vmul.f32 %v906, %v906
        %v1115 = vmul.f32 %v907, %v907
        %v1116 = vmul.f32 %v908, %v908
        %v1117 = vmul.f32 %v909, %v909
        %v1118 = vmul.f32 %v910, %v910
        %v1119 = vmul.f32 %v911, %v911
        %v1120 = vmul.f32 %v912, %v912
        %v1121 = vmul.f32 %v913, %v913
        %v1122 = vmul.f32 %v914, %v914
        %1123 = vmatprep.subr.mxu0 0.0
        %1124 = vmatpush1.msra.mxu0 %v1059
        %1125 = vmatprep.subr.mxu0 0.0
        %1126 = vmatpush1.msra.mxu0 %v1060
        %1127 = vmatprep.subr.mxu0 0.0
        %1128 = vmatpush1.msra.mxu0 %v1061
        %1129 = vmatprep.subr.mxu0 0.0
        %1130 = vmatpush1.msra.mxu0 %v1062
        %1131 = vmatprep.subr.mxu0 0.0
        %1132 = vmatpush1.msra.mxu0 %v1063
        %1133 = vmatprep.subr.mxu0 0.0
        %1134 = vmatpush1.msra.mxu0 %v1064
        %1135 = vmatprep.subr.mxu0 0.0
        %1136 = vmatpush1.msra.mxu0 %v1065
        %1137 = vmatprep.subr.mxu0 0.0
        %1138 = vmatpush1.msra.mxu0 %v1066
        %1139 = vmatprep.subr.mxu0 0.0
        %1140 = vmatpush1.msra.mxu0 %v1067
        %1141 = vmatprep.subr.mxu0 0.0
        %1142 = vmatpush1.msra.mxu0 %v1068
        %1143 = vmatprep.subr.mxu0 0.0
        %1144 = vmatpush1.msra.mxu0 %v1069
        %1145 = vmatprep.subr.mxu0 0.0
        %1146 = vmatpush1.msra.mxu0 %v1070
        %1147 = vmatprep.subr.mxu0 0.0
        %1148 = vmatpush1.msra.mxu0 %v1071
        %1149 = vmatprep.subr.mxu0 0.0
        %1150 = vmatpush1.msra.mxu0 %v1072
        %1151 = vmatprep.subr.mxu0 0.0
        %1152 = vmatpush1.msra.mxu0 %v1073
        %1153 = vmatprep.subr.mxu0 0.0
        %1154 = vmatpush1.msra.mxu0 %v1074
        %1155 = vmatprep.subr.mxu0 0.0
        %1156 = vmatpush1.msra.mxu0 %v1075
        %1157 = vmatprep.subr.mxu0 0.0
        %1158 = vmatpush1.msra.mxu0 %v1076
        %1159 = vmatprep.subr.mxu0 0.0
        %1160 = vmatpush1.msra.mxu0 %v1077
        %1161 = vmatprep.subr.mxu0 0.0
        %1162 = vmatpush1.msra.mxu0 %v1078
        %1163 = vmatprep.subr.mxu0 0.0
        %1164 = vmatpush1.msra.mxu0 %v1079
        %1165 = vmatprep.subr.mxu0 0.0
        %1166 = vmatpush1.msra.mxu0 %v1080
        %1167 = vmatprep.subr.mxu0 0.0
        %1168 = vmatpush1.msra.mxu0 %v1081
        %1169 = vmatprep.subr.mxu0 0.0
        %1170 = vmatpush1.msra.mxu0 %v1082
        %1171 = vmatprep.subr.mxu0 0.0
        %1172 = vmatpush1.msra.mxu0 %v1083
        %1173 = vmatprep.subr.mxu0 0.0
        %1174 = vmatpush1.msra.mxu0 %v1084
        %1175 = vmatprep.subr.mxu0 0.0
        %1176 = vmatpush1.msra.mxu0 %v1085
        %1177 = vmatprep.subr.mxu0 0.0
        %1178 = vmatpush1.msra.mxu0 %v1086
        %1179 = vmatprep.subr.mxu0 0.0
        %1180 = vmatpush1.msra.mxu0 %v1087
        %1181 = vmatprep.subr.mxu0 0.0
        %1182 = vmatpush1.msra.mxu0 %v1088
        %1183 = vmatprep.subr.mxu0 0.0
        %1184 = vmatpush1.msra.mxu0 %v1089
        %1185 = vmatprep.subr.mxu0 0.0
        %1186 = vmatpush1.msra.mxu0 %v1090
        %1187 = vmatprep.mubr.f32.mxu0 %v916
        %1188 = vmatmul.mubr.f32.gmra.mrb[0].mxu0 %v915
        %v1189 = vpop.f32.mrb[0].mxu0
        %v1190 = vadd.f32 0.0, %v1189
        %v1191 = vpop.f32.mrb[0].mxu0
        %1192 = vdwg.mxu0
        %1193 = vmatprep.subr.mxu0 0.0
        %1194 = vmatpush1.msra.mxu0 %v1091
        %1195 = vmatprep.subr.mxu0 0.0
        %1196 = vmatpush1.msra.mxu0 %v1092
        %1197 = vmatprep.subr.mxu0 0.0
        %1198 = vmatpush1.msra.mxu0 %v1093
        %1199 = vmatprep.subr.mxu0 0.0
        %1200 = vmatpush1.msra.mxu0 %v1094
        %1201 = vmatprep.subr.mxu0 0.0
        %1202 = vmatpush1.msra.mxu0 %v1095
        %1203 = vmatprep.subr.mxu0 0.0
        %1204 = vmatpush1.msra.mxu0 %v1096
        %1205 = vmatprep.subr.mxu0 0.0
        %1206 = vmatpush1.msra.mxu0 %v1097
        %1207 = vmatprep.subr.mxu0 0.0
        %1208 = vmatpush1.msra.mxu0 %v1098
        %1209 = vmatprep.subr.mxu0 0.0
        %1210 = vmatpush1.msra.mxu0 %v1099
        %1211 = vmatprep.subr.mxu0 0.0
        %1212 = vmatpush1.msra.mxu0 %v1100
        %1213 = vmatprep.subr.mxu0 0.0
        %1214 = vmatpush1.msra.mxu0 %v1101
        %1215 = vmatprep.subr.mxu0 0.0
        %1216 = vmatpush1.msra.mxu0 %v1102
        %1217 = vmatprep.subr.mxu0 0.0
        %1218 = vmatpush1.msra.mxu0 %v1103
        %1219 = vmatprep.subr.mxu0 0.0
        %1220 = vmatpush1.msra.mxu0 %v1104
        %1221 = vmatprep.subr.mxu0 0.0
        %1222 = vmatpush1.msra.mxu0 %v1105
        %1223 = vmatprep.subr.mxu0 0.0
        %1224 = vmatpush1.msra.mxu0 %v1106
        %1225 = vmatprep.subr.mxu0 0.0
        %1226 = vmatpush1.msra.mxu0 %v1107
        %1227 = vmatprep.subr.mxu0 0.0
        %1228 = vmatpush1.msra.mxu0 %v1108
        %1229 = vmatprep.subr.mxu0 0.0
        %1230 = vmatpush1.msra.mxu0 %v1109
        %1231 = vmatprep.subr.mxu0 0.0
        %1232 = vmatpush1.msra.mxu0 %v1110
        %1233 = vmatprep.subr.mxu0 0.0
        %1234 = vmatpush1.msra.mxu0 %v1111
        %1235 = vmatprep.subr.mxu0 0.0
        %1236 = vmatpush1.msra.mxu0 %v1112
        %1237 = vmatprep.subr.mxu0 0.0
        %1238 = vmatpush1.msra.mxu0 %v1113
        %1239 = vmatprep.subr.mxu0 0.0
        %1240 = vmatpush1.msra.mxu0 %v1114
        %1241 = vmatprep.subr.mxu0 0.0
        %1242 = vmatpush1.msra.mxu0 %v1115
        %1243 = vmatprep.subr.mxu0 0.0
        %1244 = vmatpush1.msra.mxu0 %v1116
        %1245 = vmatprep.subr.mxu0 0.0
        %1246 = vmatpush1.msra.mxu0 %v1117
        %1247 = vmatprep.subr.mxu0 0.0
        %1248 = vmatpush1.msra.mxu0 %v1118
        %1249 = vmatprep.subr.mxu0 0.0
        %1250 = vmatpush1.msra.mxu0 %v1119
        %1251 = vmatprep.subr.mxu0 0.0
        %1252 = vmatpush1.msra.mxu0 %v1120
        %1253 = vmatprep.subr.mxu0 0.0
        %1254 = vmatpush1.msra.mxu0 %v1121
        %1255 = vmatprep.subr.mxu0 0.0
        %1256 = vmatpush1.msra.mxu0 %v1122
        %1257 = vmatprep.mubr.f32.mxu0 %v918
        %1258 = vmatmul.mubr.f32.gmra.mrb[0].mxu0 %v917
        %v1259 = vpop.f32.mrb[0].mxu0
        %v1260 = vadd.f32 %v1190, %v1259
        %v1261 = vpop.f32.mrb[0].mxu0
        %1262 = vdwg.mxu0
        %v1263 = vmul.f32 %v1056, 0.015625
        %v1264 = vmul.f32 %v1056, %v1263
        %v1265 = vsub.f32 %v1260, %v1264
        %v1266 = vmul.f32 %v1265, 0.015873017
        %v1267 = vmax.f32 %v1266, 0.0
        %v1268 = vrsqrt.pop %v1267
        %v1269 = vmul.f32 %v1267, %v1268
        %vm1270 = vcmp.eq.f32.partialorder %v1267, inf
        %v1271 = vsel %vm1270, %v1267, %v1269
        %vm1272 = vcmp.eq.f32.partialorder %v1267, 0.0
        %v1273 = vand.u32 %v1267, 2147483648
        %v1274 = vsel %vm1272, %v1273, %v1271
        %1276 = vrot.lane.b32.xlu0 %v1274, 8
        %v1277 = vpop.permute.xlu0 %1276
        %vm1279 = vcmask 64512
        %v1280 = vsel %vm1279, %v1263, %v1277
        %vm1281 = vcmask 130048
        %v1282 = vsel %vm1281, %v1280, 0.0
        %1283 = vst [vmem:[%s191] sm:$0xff] %v1282
        %s1284 = sand.u32 %s115, 1
        %s1285 = scalar_lea.sflag [#allocation3], %s1284
        %s1286 = sand.u32 %s115, 1
        %s1287 = smul.addr %s1286, 8
        %s1288 = scalar_lea.vmem [#allocation2], %s1287
        // Predicated region
        $region37: #{tpu_custom_call.1} parent=35 // pred_check
          %p1289 = pneg %p125
        $region38: #{tpu_custom_call.1} parent=35 // pred_check_branch
          %1291 = sbr.rel (%p1289) target = $region40
        $region39: #{tpu_custom_call.1} parent=35 // pred_region
          %s1293 = ssub.s32 128, 128
          %1294 = vsyncadd %s1285, %s1293
          %s1295 = smul.addr %s18, 128
          %s1296 = scalar_lea.hbm %s4, %s1295
          %s1298 = sshll.u32 %s1288, 4
          %s1299 = int_to_ptr.vmem [resolvable:$true] %s1298
          %1301 = dma.vmem_to_hbm [thread:$0]  %s1299, 128, %s1296, %s1285
        $region40: #{tpu_custom_call.1} parent=35 // pred_fallthru
          _
      $region36: #{tpu_custom_call.1} parent=5 // pred_fallthru
        _
      %p1302 = scmp.le.s32.totalorder 2, %s13
      // Predicated region
      $region41: #{tpu_custom_call.1} parent=5 // pred_check
        %p1303 = pneg %p1302
      $region42: #{tpu_custom_call.1} parent=5 // pred_check_branch
        %1305 = sbr.rel (%p1303) target = $region44
      $region43: #{tpu_custom_call.1} parent=5 // pred_region
        %s1306 = ssub.s32 %s13, 2
        // Predicated region
        $region45: #{tpu_custom_call.1} parent=43 // pred_check
          %p1307 = pneg %p131
        $region46: #{tpu_custom_call.1} parent=43 // pred_check_branch
          %1309 = sbr.rel (%p1307) target = $region48
        $region47: #{tpu_custom_call.1} parent=43 // pred_region
          %s1310 = sand.u32 %s116, 1
          %s1311 = scalar_lea.sflag [#allocation3], %s1310
          %s1312 = sand.u32 %s116, 1
          %s1313 = smul.addr %s1312, 8
          %s1314 = scalar_lea.vmem [#allocation2], %s1313
          %1315 = dma.done %s1311, 128
        $region48: #{tpu_custom_call.1} parent=43 // pred_fallthru
          _
      $region44: #{tpu_custom_call.1} parent=5 // pred_fallthru
        _
    $region6: #{tpu_custom_call.1} parent=1 // loop_footer
      %s17 = sadd.s32 1, %s13
    $region7: #{tpu_custom_call.1} parent=1 // loop_footer_branch
      %12 = sbr.rel target = $region3
    $region8: #{tpu_custom_call.1} parent=1 // loop_exit
      _
    %1316 = vsyncpa [#allocation3], 1
    %s1317 = scalar_lea.sflag [#allocation3], 1
    %1318 = vsyncpa %s1317, 1

</llo_original>
